<compile_context>
chip_gen: v7x
topology: tpu7x:2x2x1
jax: 0.10.0
libtpu: 0.0.40
codegen_flags: <defaults>
</compile_context>

<pallas_src>
import functools

import jax
import jax.numpy as jnp
import numpy as np
from jax.experimental import pallas as pl
from jax.experimental.pallas import tpu as pltpu

INIT_RANGE = 0.5


def _conjunction_kernel(xt_ref, wt_ref, o_ref, *, use_not, d0):
    # xt_ref: (D0, TB)  original inputs, features on sublanes, batch on lanes
    # wt_ref: (D, N)    transposed weights (D = 2*D0 if use_not), resident
    # o_ref : (N, TB)   transposed output tile, lane-dense
    xt = xt_ref[...].astype(jnp.float32)                      # (D0, TB) == x
    a = 1.0 - xt                                              # (1 - x)
    n = o_ref.shape[0]
    for j in range(n):                                        # N small & static
        w1 = wt_ref[:d0, j:j + 1].astype(jnp.float32)         # (D0, 1)
        log_sum = jnp.sum(jnp.log(1.0 - w1 * a), axis=0,
                          keepdims=True)                      # (1, TB)
        if use_not:
            # concatenated "not" half: (1 - x_cat) == x
            w2 = wt_ref[d0:, j:j + 1].astype(jnp.float32)     # (D0, 1)
            log_sum = log_sum + jnp.sum(jnp.log(1.0 - w2 * xt), axis=0,
                                        keepdims=True)
        o_ref[j:j + 1, :] = -1.0 / (-1.0 + log_sum)


def conjunction_forward(x, W, *, use_not=False, batch_tile=1024):
    """Pallas implementation of ConjunctionLayer.forward.

    x : (B, input_dim) float32
    W : (n, D) float32, D = input_dim (or 2*input_dim if use_not)
    returns (B, n) float32
    """
    x = x.astype(jnp.float32)
    W = W.astype(jnp.float32)
    B, D0 = x.shape
    N, Dw = W.shape
    D = 2 * D0 if use_not else D0
    assert D == Dw, f"feature dim mismatch: expected W dim {D}, got {Dw}"

    # Batch tile: multiple of 128 lanes, capped at batch_tile, no over-padding
    # for small batches.
    TB = min(batch_tile, ((B + 127) // 128) * 128)
    TB = max(128, (TB // 128) * 128)
    B_pad = pl.cdiv(B, TB) * TB

    xt = x.T                                                  # (D0, B) batch on lanes
    if B_pad != B:
        # Padded batch columns use x = 1.0 -> first-half term = 1 (log 0),
        # second-half term = 1 - W2 >= 0; padded columns are sliced off below.
        xt = jnp.pad(xt, ((0, 0), (0, B_pad - B)), constant_values=1.0)
    wt = W.T                                                  # (D, N)

    cost = pl.CostEstimate(
        flops=3 * B_pad * D * N,
        transcendentals=B_pad * D * N,
        bytes_accessed=4 * (B_pad * D0 + D * N + B_pad * N),
    )

    kernel = functools.partial(_conjunction_kernel, use_not=use_not, d0=D0)

    out_t = pl.pallas_call(
        kernel,
        out_shape=jax.ShapeDtypeStruct((N, B_pad), jnp.float32),
        grid_spec=pltpu.PrefetchScalarGridSpec(
            num_scalar_prefetch=0,
            grid=(B_pad // TB,),
            in_specs=[
                pl.BlockSpec((D0, TB), lambda i: (0, i)),     # x batch tile
                pl.BlockSpec((D, N), lambda i: (0, 0)),       # full Wt, resident
            ],
            out_specs=pl.BlockSpec((N, TB), lambda i: (0, i)),
        ),
        compiler_params=pltpu.CompilerParams(
            dimension_semantics=("parallel",)),
        cost_estimate=cost,
    )(xt, wt)

    return out_t[:, :B].T                                     # (B, N)


def conjunction_forward_ref(x, W, *, use_not=False):
    """Pure-JAX reference mirroring the PyTorch forward."""
    if use_not:
        x = jnp.concatenate([x, 1.0 - x], axis=1)
    term = 1.0 - (1.0 - x)[:, :, None] * W.T[None, :, :]      # (B, D, N)
    return -1.0 / (-1.0 + jnp.sum(jnp.log(term), axis=1))     # (B, N)


if __name__ == "__main__":
    # Module config: ConjunctionLayer(n=16, input_dim=32, use_not=True)
    n = 16
    input_dim = 32
    use_not = True
    D = input_dim * 2 if use_not else input_dim

    key = jax.random.PRNGKey(0)
    kx, kw, kx2 = jax.random.split(key, 3)
    # x in [0, 1] (logical/fuzzy inputs), W ~ INIT_RANGE * U[0, 1) as in __init__.
    W = INIT_RANGE * jax.random.uniform(kw, (n, D), dtype=jnp.float32)

    # Small batch (exercises padding to one 128-lane tile).
    B = 8
    x = jax.random.uniform(kx, (B, input_dim), dtype=jnp.float32)
    out = jax.block_until_ready(conjunction_forward(x, W, use_not=use_not))
    ref = conjunction_forward_ref(x, W, use_not=use_not)
    np.testing.assert_allclose(np.asarray(out), np.asarray(ref),
                               rtol=1e-5, atol=1e-5)
    assert out.shape == (B, n)

    # Larger batch (exercises multi-step parallel grid + tail padding).
    B2 = 1500
    x2 = jax.random.uniform(kx2, (B2, input_dim), dtype=jnp.float32)
    out2 = jax.block_until_ready(conjunction_forward(x2, W, use_not=use_not))
    ref2 = conjunction_forward_ref(x2, W, use_not=use_not)
    np.testing.assert_allclose(np.asarray(out2), np.asarray(ref2),
                               rtol=1e-5, atol=1e-5)
    assert out2.shape == (B2, n)

    print("KERNEL_OK")
</pallas_src>

<mosaic_0001>
module attributes {stable_mosaic.version = 11 : i64} {
  func.func @_conjunction_kernel(%arg0: i32, %arg1: memref<32x128xf32, #tpu.memory_space<vmem>>, %arg2: memref<64x16xf32, #tpu.memory_space<vmem>>, %arg3: memref<16x128xf32, #tpu.memory_space<vmem>>) attributes {dimension_semantics = [#tpu.dimension_semantics<parallel>], iteration_bounds = array<i64: 1>, scalar_prefetch = 0 : i64, scratch_operands = 0 : i64, tpu.core_type = #tpu.core_type<tc>, window_params = [{transform_indices = @transform_0, window_bounds = array<i64: 32, 128>}, {pipeline_mode = #tpu.pipeline_mode<synchronous>, transform_indices = @transform_1, window_bounds = array<i64: 64, 16>}, {transform_indices = @transform_2, window_bounds = array<i64: 16, 128>}]} {
    %c0 = arith.constant 0 : index
    %c0_0 = arith.constant 0 : index
    %0 = vector.load %arg1[%c0, %c0_0] : memref<32x128xf32, #tpu.memory_space<vmem>>, vector<32x128xf32>
    %cst = arith.constant 1.000000e+00 : f32
    %1 = vector.broadcast %cst : f32 to vector<32x128xf32>
    %2 = arith.subf %1, %0 : vector<32x128xf32>
    %c0_1 = arith.constant 0 : index
    %c0_2 = arith.constant 0 : index
    %3 = vector.load %arg2[%c0_1, %c0_2] : memref<64x16xf32, #tpu.memory_space<vmem>>, vector<32x1xf32>
    %4 = vector.broadcast %3 : vector<32x1xf32> to vector<32x128xf32>
    %5 = arith.mulf %4, %2 : vector<32x128xf32>
    %cst_3 = arith.constant 1.000000e+00 : f32
    %6 = vector.broadcast %cst_3 : f32 to vector<32x128xf32>
    %7 = arith.subf %6, %5 : vector<32x128xf32>
    %8 = math.log %7 : vector<32x128xf32>
    %cst_4 = arith.constant dense<0.000000e+00> : vector<128xf32>
    %9 = vector.multi_reduction <add>, %8, %cst_4 [0] : vector<32x128xf32> to vector<128xf32>
    %10 = vector.shape_cast %9 : vector<128xf32> to vector<1x128xf32>
    %c32 = arith.constant 32 : index
    %c0_5 = arith.constant 0 : index
    %11 = vector.load %arg2[%c32, %c0_5] : memref<64x16xf32, #tpu.memory_space<vmem>>, vector<32x1xf32>
    %12 = vector.broadcast %11 : vector<32x1xf32> to vector<32x128xf32>
    %13 = arith.mulf %12, %0 : vector<32x128xf32>
    %cst_6 = arith.constant 1.000000e+00 : f32
    %14 = vector.broadcast %cst_6 : f32 to vector<32x128xf32>
    %15 = arith.subf %14, %13 : vector<32x128xf32>
    %16 = math.log %15 : vector<32x128xf32>
    %cst_7 = arith.constant dense<0.000000e+00> : vector<128xf32>
    %17 = vector.multi_reduction <add>, %16, %cst_7 [0] : vector<32x128xf32> to vector<128xf32>
    %18 = vector.shape_cast %17 : vector<128xf32> to vector<1x128xf32>
    %19 = arith.addf %10, %18 : vector<1x128xf32>
    %cst_8 = arith.constant -1.000000e+00 : f32
    %20 = vector.broadcast %cst_8 : f32 to vector<1x128xf32>
    %21 = arith.addf %20, %19 : vector<1x128xf32>
    %cst_9 = arith.constant -1.000000e+00 : f32
    %22 = vector.broadcast %cst_9 : f32 to vector<1x128xf32>
    %23 = arith.divf %22, %21 : vector<1x128xf32>
    %c0_10 = arith.constant 0 : index
    %c0_11 = arith.constant 0 : index
    %24 = vector.load %arg3[%c0_10, %c0_11] : memref<16x128xf32, #tpu.memory_space<vmem>>, vector<1x128xf32>
    tpu.vector_store %arg3[%c0_10, %c0_11], %23 {strides = array<i32>} : memref<16x128xf32, #tpu.memory_space<vmem>>, vector<1x128xf32>,
    %c0_12 = arith.constant 0 : index
    %c1 = arith.constant 1 : index
    %25 = vector.load %arg2[%c0_12, %c1] : memref<64x16xf32, #tpu.memory_space<vmem>>, vector<32x1xf32>
    %26 = vector.broadcast %25 : vector<32x1xf32> to vector<32x128xf32>
    %27 = arith.mulf %26, %2 : vector<32x128xf32>
    %cst_13 = arith.constant 1.000000e+00 : f32
    %28 = vector.broadcast %cst_13 : f32 to vector<32x128xf32>
    %29 = arith.subf %28, %27 : vector<32x128xf32>
    %30 = math.log %29 : vector<32x128xf32>
    %cst_14 = arith.constant dense<0.000000e+00> : vector<128xf32>
    %31 = vector.multi_reduction <add>, %30, %cst_14 [0] : vector<32x128xf32> to vector<128xf32>
    %32 = vector.shape_cast %31 : vector<128xf32> to vector<1x128xf32>
    %c32_15 = arith.constant 32 : index
    %c1_16 = arith.constant 1 : index
    %33 = vector.load %arg2[%c32_15, %c1_16] : memref<64x16xf32, #tpu.memory_space<vmem>>, vector<32x1xf32>
    %34 = vector.broadcast %33 : vector<32x1xf32> to vector<32x128xf32>
    %35 = arith.mulf %34, %0 : vector<32x128xf32>
    %cst_17 = arith.constant 1.000000e+00 : f32
    %36 = vector.broadcast %cst_17 : f32 to vector<32x128xf32>
    %37 = arith.subf %36, %35 : vector<32x128xf32>
    %38 = math.log %37 : vector<32x128xf32>
    %cst_18 = arith.constant dense<0.000000e+00> : vector<128xf32>
    %39 = vector.multi_reduction <add>, %38, %cst_18 [0] : vector<32x128xf32> to vector<128xf32>
    %40 = vector.shape_cast %39 : vector<128xf32> to vector<1x128xf32>
    %41 = arith.addf %32, %40 : vector<1x128xf32>
    %cst_19 = arith.constant -1.000000e+00 : f32
    %42 = vector.broadcast %cst_19 : f32 to vector<1x128xf32>
    %43 = arith.addf %42, %41 : vector<1x128xf32>
    %cst_20 = arith.constant -1.000000e+00 : f32
    %44 = vector.broadcast %cst_20 : f32 to vector<1x128xf32>
    %45 = arith.divf %44, %43 : vector<1x128xf32>
    %c1_21 = arith.constant 1 : index
    %c0_22 = arith.constant 0 : index
    %46 = vector.load %arg3[%c1_21, %c0_22] : memref<16x128xf32, #tpu.memory_space<vmem>>, vector<1x128xf32>
    tpu.vector_store %arg3[%c1_21, %c0_22], %45 {strides = array<i32>} : memref<16x128xf32, #tpu.memory_space<vmem>>, vector<1x128xf32>,
    %c0_23 = arith.constant 0 : index
    %c2 = arith.constant 2 : index
    %47 = vector.load %arg2[%c0_23, %c2] : memref<64x16xf32, #tpu.memory_space<vmem>>, vector<32x1xf32>
    %48 = vector.broadcast %47 : vector<32x1xf32> to vector<32x128xf32>
    %49 = arith.mulf %48, %2 : vector<32x128xf32>
    %cst_24 = arith.constant 1.000000e+00 : f32
    %50 = vector.broadcast %cst_24 : f32 to vector<32x128xf32>
    %51 = arith.subf %50, %49 : vector<32x128xf32>
    %52 = math.log %51 : vector<32x128xf32>
    %cst_25 = arith.constant dense<0.000000e+00> : vector<128xf32>
    %53 = vector.multi_reduction <add>, %52, %cst_25 [0] : vector<32x128xf32> to vector<128xf32>
    %54 = vector.shape_cast %53 : vector<128xf32> to vector<1x128xf32>
    %c32_26 = arith.constant 32 : index
    %c2_27 = arith.constant 2 : index
    %55 = vector.load %arg2[%c32_26, %c2_27] : memref<64x16xf32, #tpu.memory_space<vmem>>, vector<32x1xf32>
    %56 = vector.broadcast %55 : vector<32x1xf32> to vector<32x128xf32>
    %57 = arith.mulf %56, %0 : vector<32x128xf32>
    %cst_28 = arith.constant 1.000000e+00 : f32
    %58 = vector.broadcast %cst_28 : f32 to vector<32x128xf32>
    %59 = arith.subf %58, %57 : vector<32x128xf32>
    %60 = math.log %59 : vector<32x128xf32>
    %cst_29 = arith.constant dense<0.000000e+00> : vector<128xf32>
    %61 = vector.multi_reduction <add>, %60, %cst_29 [0] : vector<32x128xf32> to vector<128xf32>
    %62 = vector.shape_cast %61 : vector<128xf32> to vector<1x128xf32>
    %63 = arith.addf %54, %62 : vector<1x128xf32>
    %cst_30 = arith.constant -1.000000e+00 : f32
    %64 = vector.broadcast %cst_30 : f32 to vector<1x128xf32>
    %65 = arith.addf %64, %63 : vector<1x128xf32>
    %cst_31 = arith.constant -1.000000e+00 : f32
    %66 = vector.broadcast %cst_31 : f32 to vector<1x128xf32>
    %67 = arith.divf %66, %65 : vector<1x128xf32>
    %c2_32 = arith.constant 2 : index
    %c0_33 = arith.constant 0 : index
    %68 = vector.load %arg3[%c2_32, %c0_33] : memref<16x128xf32, #tpu.memory_space<vmem>>, vector<1x128xf32>
    tpu.vector_store %arg3[%c2_32, %c0_33], %67 {strides = array<i32>} : memref<16x128xf32, #tpu.memory_space<vmem>>, vector<1x128xf32>,
    %c0_34 = arith.constant 0 : index
    %c3 = arith.constant 3 : index
    %69 = vector.load %arg2[%c0_34, %c3] : memref<64x16xf32, #tpu.memory_space<vmem>>, vector<32x1xf32>
    %70 = vector.broadcast %69 : vector<32x1xf32> to vector<32x128xf32>
    %71 = arith.mulf %70, %2 : vector<32x128xf32>
    %cst_35 = arith.constant 1.000000e+00 : f32
    %72 = vector.broadcast %cst_35 : f32 to vector<32x128xf32>
    %73 = arith.subf %72, %71 : vector<32x128xf32>
    %74 = math.log %73 : vector<32x128xf32>
    %cst_36 = arith.constant dense<0.000000e+00> : vector<128xf32>
    %75 = vector.multi_reduction <add>, %74, %cst_36 [0] : vector<32x128xf32> to vector<128xf32>
    %76 = vector.shape_cast %75 : vector<128xf32> to vector<1x128xf32>
    %c32_37 = arith.constant 32 : index
    %c3_38 = arith.constant 3 : index
    %77 = vector.load %arg2[%c32_37, %c3_38] : memref<64x16xf32, #tpu.memory_space<vmem>>, vector<32x1xf32>
    %78 = vector.broadcast %77 : vector<32x1xf32> to vector<32x128xf32>
    %79 = arith.mulf %78, %0 : vector<32x128xf32>
    %cst_39 = arith.constant 1.000000e+00 : f32
    %80 = vector.broadcast %cst_39 : f32 to vector<32x128xf32>
    %81 = arith.subf %80, %79 : vector<32x128xf32>
    %82 = math.log %81 : vector<32x128xf32>
    %cst_40 = arith.constant dense<0.000000e+00> : vector<128xf32>
    %83 = vector.multi_reduction <add>, %82, %cst_40 [0] : vector<32x128xf32> to vector<128xf32>
    %84 = vector.shape_cast %83 : vector<128xf32> to vector<1x128xf32>
    %85 = arith.addf %76, %84 : vector<1x128xf32>
    %cst_41 = arith.constant -1.000000e+00 : f32
    %86 = vector.broadcast %cst_41 : f32 to vector<1x128xf32>
    %87 = arith.addf %86, %85 : vector<1x128xf32>
    %cst_42 = arith.constant -1.000000e+00 : f32
    %88 = vector.broadcast %cst_42 : f32 to vector<1x128xf32>
    %89 = arith.divf %88, %87 : vector<1x128xf32>
    %c3_43 = arith.constant 3 : index
    %c0_44 = arith.constant 0 : index
    %90 = vector.load %arg3[%c3_43, %c0_44] : memref<16x128xf32, #tpu.memory_space<vmem>>, vector<1x128xf32>
    tpu.vector_store %arg3[%c3_43, %c0_44], %89 {strides = array<i32>} : memref<16x128xf32, #tpu.memory_space<vmem>>, vector<1x128xf32>,
    %c0_45 = arith.constant 0 : index
    %c4 = arith.constant 4 : index
    %91 = vector.load %arg2[%c0_45, %c4] : memref<64x16xf32, #tpu.memory_space<vmem>>, vector<32x1xf32>
    %92 = vector.broadcast %91 : vector<32x1xf32> to vector<32x128xf32>
    %93 = arith.mulf %92, %2 : vector<32x128xf32>
    %cst_46 = arith.constant 1.000000e+00 : f32
    %94 = vector.broadcast %cst_46 : f32 to vector<32x128xf32>
    %95 = arith.subf %94, %93 : vector<32x128xf32>
    %96 = math.log %95 : vector<32x128xf32>
    %cst_47 = arith.constant dense<0.000000e+00> : vector<128xf32>
    %97 = vector.multi_reduction <add>, %96, %cst_47 [0] : vector<32x128xf32> to vector<128xf32>
    %98 = vector.shape_cast %97 : vector<128xf32> to vector<1x128xf32>
    %c32_48 = arith.constant 32 : index
    %c4_49 = arith.constant 4 : index
    %99 = vector.load %arg2[%c32_48, %c4_49] : memref<64x16xf32, #tpu.memory_space<vmem>>, vector<32x1xf32>
    %100 = vector.broadcast %99 : vector<32x1xf32> to vector<32x128xf32>
    %101 = arith.mulf %100, %0 : vector<32x128xf32>
    %cst_50 = arith.constant 1.000000e+00 : f32
    %102 = vector.broadcast %cst_50 : f32 to vector<32x128xf32>
    %103 = arith.subf %102, %101 : vector<32x128xf32>
    %104 = math.log %103 : vector<32x128xf32>
    %cst_51 = arith.constant dense<0.000000e+00> : vector<128xf32>
    %105 = vector.multi_reduction <add>, %104, %cst_51 [0] : vector<32x128xf32> to vector<128xf32>
    %106 = vector.shape_cast %105 : vector<128xf32> to vector<1x128xf32>
    %107 = arith.addf %98, %106 : vector<1x128xf32>
    %cst_52 = arith.constant -1.000000e+00 : f32
    %108 = vector.broadcast %cst_52 : f32 to vector<1x128xf32>
    %109 = arith.addf %108, %107 : vector<1x128xf32>
    %cst_53 = arith.constant -1.000000e+00 : f32
    %110 = vector.broadcast %cst_53 : f32 to vector<1x128xf32>
    %111 = arith.divf %110, %109 : vector<1x128xf32>
    %c4_54 = arith.constant 4 : index
    %c0_55 = arith.constant 0 : index
    %112 = vector.load %arg3[%c4_54, %c0_55] : memref<16x128xf32, #tpu.memory_space<vmem>>, vector<1x128xf32>
    tpu.vector_store %arg3[%c4_54, %c0_55], %111 {strides = array<i32>} : memref<16x128xf32, #tpu.memory_space<vmem>>, vector<1x128xf32>,
    %c0_56 = arith.constant 0 : index
    %c5 = arith.constant 5 : index
    %113 = vector.load %arg2[%c0_56, %c5] : memref<64x16xf32, #tpu.memory_space<vmem>>, vector<32x1xf32>
    %114 = vector.broadcast %113 : vector<32x1xf32> to vector<32x128xf32>
    %115 = arith.mulf %114, %2 : vector<32x128xf32>
    %cst_57 = arith.constant 1.000000e+00 : f32
    %116 = vector.broadcast %cst_57 : f32 to vector<32x128xf32>
    %117 = arith.subf %116, %115 : vector<32x128xf32>
    %118 = math.log %117 : vector<32x128xf32>
    %cst_58 = arith.constant dense<0.000000e+00> : vector<128xf32>
    %119 = vector.multi_reduction <add>, %118, %cst_58 [0] : vector<32x128xf32> to vector<128xf32>
    %120 = vector.shape_cast %119 : vector<128xf32> to vector<1x128xf32>
    %c32_59 = arith.constant 32 : index
    %c5_60 = arith.constant 5 : index
    %121 = vector.load %arg2[%c32_59, %c5_60] : memref<64x16xf32, #tpu.memory_space<vmem>>, vector<32x1xf32>
    %122 = vector.broadcast %121 : vector<32x1xf32> to vector<32x128xf32>
    %123 = arith.mulf %122, %0 : vector<32x128xf32>
    %cst_61 = arith.constant 1.000000e+00 : f32
    %124 = vector.broadcast %cst_61 : f32 to vector<32x128xf32>
    %125 = arith.subf %124, %123 : vector<32x128xf32>
    %126 = math.log %125 : vector<32x128xf32>
    %cst_62 = arith.constant dense<0.000000e+00> : vector<128xf32>
    %127 = vector.multi_reduction <add>, %126, %cst_62 [0] : vector<32x128xf32> to vector<128xf32>
    %128 = vector.shape_cast %127 : vector<128xf32> to vector<1x128xf32>
    %129 = arith.addf %120, %128 : vector<1x128xf32>
    %cst_63 = arith.constant -1.000000e+00 : f32
    %130 = vector.broadcast %cst_63 : f32 to vector<1x128xf32>
    %131 = arith.addf %130, %129 : vector<1x128xf32>
    %cst_64 = arith.constant -1.000000e+00 : f32
    %132 = vector.broadcast %cst_64 : f32 to vector<1x128xf32>
    %133 = arith.divf %132, %131 : vector<1x128xf32>
    %c5_65 = arith.constant 5 : index
    %c0_66 = arith.constant 0 : index
    %134 = vector.load %arg3[%c5_65, %c0_66] : memref<16x128xf32, #tpu.memory_space<vmem>>, vector<1x128xf32>
    tpu.vector_store %arg3[%c5_65, %c0_66], %133 {strides = array<i32>} : memref<16x128xf32, #tpu.memory_space<vmem>>, vector<1x128xf32>,
    %c0_67 = arith.constant 0 : index
    %c6 = arith.constant 6 : index
    %135 = vector.load %arg2[%c0_67, %c6] : memref<64x16xf32, #tpu.memory_space<vmem>>, vector<32x1xf32>
    %136 = vector.broadcast %135 : vector<32x1xf32> to vector<32x128xf32>
    %137 = arith.mulf %136, %2 : vector<32x128xf32>
    %cst_68 = arith.constant 1.000000e+00 : f32
    %138 = vector.broadcast %cst_68 : f32 to vector<32x128xf32>
    %139 = arith.subf %138, %137 : vector<32x128xf32>
    %140 = math.log %139 : vector<32x128xf32>
    %cst_69 = arith.constant dense<0.000000e+00> : vector<128xf32>
    %141 = vector.multi_reduction <add>, %140, %cst_69 [0] : vector<32x128xf32> to vector<128xf32>
    %142 = vector.shape_cast %141 : vector<128xf32> to vector<1x128xf32>
    %c32_70 = arith.constant 32 : index
    %c6_71 = arith.constant 6 : index
    %143 = vector.load %arg2[%c32_70, %c6_71] : memref<64x16xf32, #tpu.memory_space<vmem>>, vector<32x1xf32>
    %144 = vector.broadcast %143 : vector<32x1xf32> to vector<32x128xf32>
    %145 = arith.mulf %144, %0 : vector<32x128xf32>
    %cst_72 = arith.constant 1.000000e+00 : f32
    %146 = vector.broadcast %cst_72 : f32 to vector<32x128xf32>
    %147 = arith.subf %146, %145 : vector<32x128xf32>
    %148 = math.log %147 : vector<32x128xf32>
    %cst_73 = arith.constant dense<0.000000e+00> : vector<128xf32>
    %149 = vector.multi_reduction <add>, %148, %cst_73 [0] : vector<32x128xf32> to vector<128xf32>
    %150 = vector.shape_cast %149 : vector<128xf32> to vector<1x128xf32>
    %151 = arith.addf %142, %150 : vector<1x128xf32>
    %cst_74 = arith.constant -1.000000e+00 : f32
    %152 = vector.broadcast %cst_74 : f32 to vector<1x128xf32>
    %153 = arith.addf %152, %151 : vector<1x128xf32>
    %cst_75 = arith.constant -1.000000e+00 : f32
    %154 = vector.broadcast %cst_75 : f32 to vector<1x128xf32>
    %155 = arith.divf %154, %153 : vector<1x128xf32>
    %c6_76 = arith.constant 6 : index
    %c0_77 = arith.constant 0 : index
    %156 = vector.load %arg3[%c6_76, %c0_77] : memref<16x128xf32, #tpu.memory_space<vmem>>, vector<1x128xf32>
    tpu.vector_store %arg3[%c6_76, %c0_77], %155 {strides = array<i32>} : memref<16x128xf32, #tpu.memory_space<vmem>>, vector<1x128xf32>,
    %c0_78 = arith.constant 0 : index
    %c7 = arith.constant 7 : index
    %157 = vector.load %arg2[%c0_78, %c7] : memref<64x16xf32, #tpu.memory_space<vmem>>, vector<32x1xf32>
    %158 = vector.broadcast %157 : vector<32x1xf32> to vector<32x128xf32>
    %159 = arith.mulf %158, %2 : vector<32x128xf32>
    %cst_79 = arith.constant 1.000000e+00 : f32
    %160 = vector.broadcast %cst_79 : f32 to vector<32x128xf32>
    %161 = arith.subf %160, %159 : vector<32x128xf32>
    %162 = math.log %161 : vector<32x128xf32>
    %cst_80 = arith.constant dense<0.000000e+00> : vector<128xf32>
    %163 = vector.multi_reduction <add>, %162, %cst_80 [0] : vector<32x128xf32> to vector<128xf32>
    %164 = vector.shape_cast %163 : vector<128xf32> to vector<1x128xf32>
    %c32_81 = arith.constant 32 : index
    %c7_82 = arith.constant 7 : index
    %165 = vector.load %arg2[%c32_81, %c7_82] : memref<64x16xf32, #tpu.memory_space<vmem>>, vector<32x1xf32>
    %166 = vector.broadcast %165 : vector<32x1xf32> to vector<32x128xf32>
    %167 = arith.mulf %166, %0 : vector<32x128xf32>
    %cst_83 = arith.constant 1.000000e+00 : f32
    %168 = vector.broadcast %cst_83 : f32 to vector<32x128xf32>
    %169 = arith.subf %168, %167 : vector<32x128xf32>
    %170 = math.log %169 : vector<32x128xf32>
    %cst_84 = arith.constant dense<0.000000e+00> : vector<128xf32>
    %171 = vector.multi_reduction <add>, %170, %cst_84 [0] : vector<32x128xf32> to vector<128xf32>
    %172 = vector.shape_cast %171 : vector<128xf32> to vector<1x128xf32>
    %173 = arith.addf %164, %172 : vector<1x128xf32>
    %cst_85 = arith.constant -1.000000e+00 : f32
    %174 = vector.broadcast %cst_85 : f32 to vector<1x128xf32>
    %175 = arith.addf %174, %173 : vector<1x128xf32>
    %cst_86 = arith.constant -1.000000e+00 : f32
    %176 = vector.broadcast %cst_86 : f32 to vector<1x128xf32>
    %177 = arith.divf %176, %175 : vector<1x128xf32>
    %c7_87 = arith.constant 7 : index
    %c0_88 = arith.constant 0 : index
    %178 = vector.load %arg3[%c7_87, %c0_88] : memref<16x128xf32, #tpu.memory_space<vmem>>, vector<1x128xf32>
    tpu.vector_store %arg3[%c7_87, %c0_88], %177 {strides = array<i32>} : memref<16x128xf32, #tpu.memory_space<vmem>>, vector<1x128xf32>,
    %c0_89 = arith.constant 0 : index
    %c8 = arith.constant 8 : index
    %179 = vector.load %arg2[%c0_89, %c8] : memref<64x16xf32, #tpu.memory_space<vmem>>, vector<32x1xf32>
    %180 = vector.broadcast %179 : vector<32x1xf32> to vector<32x128xf32>
    %181 = arith.mulf %180, %2 : vector<32x128xf32>
    %cst_90 = arith.constant 1.000000e+00 : f32
    %182 = vector.broadcast %cst_90 : f32 to vector<32x128xf32>
    %183 = arith.subf %182, %181 : vector<32x128xf32>
    %184 = math.log %183 : vector<32x128xf32>
    %cst_91 = arith.constant dense<0.000000e+00> : vector<128xf32>
    %185 = vector.multi_reduction <add>, %184, %cst_91 [0] : vector<32x128xf32> to vector<128xf32>
    %186 = vector.shape_cast %185 : vector<128xf32> to vector<1x128xf32>
    %c32_92 = arith.constant 32 : index
    %c8_93 = arith.constant 8 : index
    %187 = vector.load %arg2[%c32_92, %c8_93] : memref<64x16xf32, #tpu.memory_space<vmem>>, vector<32x1xf32>
    %188 = vector.broadcast %187 : vector<32x1xf32> to vector<32x128xf32>
    %189 = arith.mulf %188, %0 : vector<32x128xf32>
    %cst_94 = arith.constant 1.000000e+00 : f32
    %190 = vector.broadcast %cst_94 : f32 to vector<32x128xf32>
    %191 = arith.subf %190, %189 : vector<32x128xf32>
    %192 = math.log %191 : vector<32x128xf32>
    %cst_95 = arith.constant dense<0.000000e+00> : vector<128xf32>
    %193 = vector.multi_reduction <add>, %192, %cst_95 [0] : vector<32x128xf32> to vector<128xf32>
    %194 = vector.shape_cast %193 : vector<128xf32> to vector<1x128xf32>
    %195 = arith.addf %186, %194 : vector<1x128xf32>
    %cst_96 = arith.constant -1.000000e+00 : f32
    %196 = vector.broadcast %cst_96 : f32 to vector<1x128xf32>
    %197 = arith.addf %196, %195 : vector<1x128xf32>
    %cst_97 = arith.constant -1.000000e+00 : f32
    %198 = vector.broadcast %cst_97 : f32 to vector<1x128xf32>
    %199 = arith.divf %198, %197 : vector<1x128xf32>
    %c8_98 = arith.constant 8 : index
    %c0_99 = arith.constant 0 : index
    %200 = vector.load %arg3[%c8_98, %c0_99] : memref<16x128xf32, #tpu.memory_space<vmem>>, vector<1x128xf32>
    tpu.vector_store %arg3[%c8_98, %c0_99], %199 {strides = array<i32>} : memref<16x128xf32, #tpu.memory_space<vmem>>, vector<1x128xf32>,
    %c0_100 = arith.constant 0 : index
    %c9 = arith.constant 9 : index
    %201 = vector.load %arg2[%c0_100, %c9] : memref<64x16xf32, #tpu.memory_space<vmem>>, vector<32x1xf32>
    %202 = vector.broadcast %201 : vector<32x1xf32> to vector<32x128xf32>
    %203 = arith.mulf %202, %2 : vector<32x128xf32>
    %cst_101 = arith.constant 1.000000e+00 : f32
    %204 = vector.broadcast %cst_101 : f32 to vector<32x128xf32>
    %205 = arith.subf %204, %203 : vector<32x128xf32>
    %206 = math.log %205 : vector<32x128xf32>
    %cst_102 = arith.constant dense<0.000000e+00> : vector<128xf32>
    %207 = vector.multi_reduction <add>, %206, %cst_102 [0] : vector<32x128xf32> to vector<128xf32>
    %208 = vector.shape_cast %207 : vector<128xf32> to vector<1x128xf32>
    %c32_103 = arith.constant 32 : index
    %c9_104 = arith.constant 9 : index
    %209 = vector.load %arg2[%c32_103, %c9_104] : memref<64x16xf32, #tpu.memory_space<vmem>>, vector<32x1xf32>
    %210 = vector.broadcast %209 : vector<32x1xf32> to vector<32x128xf32>
    %211 = arith.mulf %210, %0 : vector<32x128xf32>
    %cst_105 = arith.constant 1.000000e+00 : f32
    %212 = vector.broadcast %cst_105 : f32 to vector<32x128xf32>
    %213 = arith.subf %212, %211 : vector<32x128xf32>
    %214 = math.log %213 : vector<32x128xf32>
    %cst_106 = arith.constant dense<0.000000e+00> : vector<128xf32>
    %215 = vector.multi_reduction <add>, %214, %cst_106 [0] : vector<32x128xf32> to vector<128xf32>
    %216 = vector.shape_cast %215 : vector<128xf32> to vector<1x128xf32>
    %217 = arith.addf %208, %216 : vector<1x128xf32>
    %cst_107 = arith.constant -1.000000e+00 : f32
    %218 = vector.broadcast %cst_107 : f32 to vector<1x128xf32>
    %219 = arith.addf %218, %217 : vector<1x128xf32>
    %cst_108 = arith.constant -1.000000e+00 : f32
    %220 = vector.broadcast %cst_108 : f32 to vector<1x128xf32>
    %221 = arith.divf %220, %219 : vector<1x128xf32>
    %c9_109 = arith.constant 9 : index
    %c0_110 = arith.constant 0 : index
    %222 = vector.load %arg3[%c9_109, %c0_110] : memref<16x128xf32, #tpu.memory_space<vmem>>, vector<1x128xf32>
    tpu.vector_store %arg3[%c9_109, %c0_110], %221 {strides = array<i32>} : memref<16x128xf32, #tpu.memory_space<vmem>>, vector<1x128xf32>,
    %c0_111 = arith.constant 0 : index
    %c10 = arith.constant 10 : index
    %223 = vector.load %arg2[%c0_111, %c10] : memref<64x16xf32, #tpu.memory_space<vmem>>, vector<32x1xf32>
    %224 = vector.broadcast %223 : vector<32x1xf32> to vector<32x128xf32>
    %225 = arith.mulf %224, %2 : vector<32x128xf32>
    %cst_112 = arith.constant 1.000000e+00 : f32
    %226 = vector.broadcast %cst_112 : f32 to vector<32x128xf32>
    %227 = arith.subf %226, %225 : vector<32x128xf32>
    %228 = math.log %227 : vector<32x128xf32>
    %cst_113 = arith.constant dense<0.000000e+00> : vector<128xf32>
    %229 = vector.multi_reduction <add>, %228, %cst_113 [0] : vector<32x128xf32> to vector<128xf32>
    %230 = vector.shape_cast %229 : vector<128xf32> to vector<1x128xf32>
    %c32_114 = arith.constant 32 : index
    %c10_115 = arith.constant 10 : index
    %231 = vector.load %arg2[%c32_114, %c10_115] : memref<64x16xf32, #tpu.memory_space<vmem>>, vector<32x1xf32>
    %232 = vector.broadcast %231 : vector<32x1xf32> to vector<32x128xf32>
    %233 = arith.mulf %232, %0 : vector<32x128xf32>
    %cst_116 = arith.constant 1.000000e+00 : f32
    %234 = vector.broadcast %cst_116 : f32 to vector<32x128xf32>
    %235 = arith.subf %234, %233 : vector<32x128xf32>
    %236 = math.log %235 : vector<32x128xf32>
    %cst_117 = arith.constant dense<0.000000e+00> : vector<128xf32>
    %237 = vector.multi_reduction <add>, %236, %cst_117 [0] : vector<32x128xf32> to vector<128xf32>
    %238 = vector.shape_cast %237 : vector<128xf32> to vector<1x128xf32>
    %239 = arith.addf %230, %238 : vector<1x128xf32>
    %cst_118 = arith.constant -1.000000e+00 : f32
    %240 = vector.broadcast %cst_118 : f32 to vector<1x128xf32>
    %241 = arith.addf %240, %239 : vector<1x128xf32>
    %cst_119 = arith.constant -1.000000e+00 : f32
    %242 = vector.broadcast %cst_119 : f32 to vector<1x128xf32>
    %243 = arith.divf %242, %241 : vector<1x128xf32>
    %c10_120 = arith.constant 10 : index
    %c0_121 = arith.constant 0 : index
    %244 = vector.load %arg3[%c10_120, %c0_121] : memref<16x128xf32, #tpu.memory_space<vmem>>, vector<1x128xf32>
    tpu.vector_store %arg3[%c10_120, %c0_121], %243 {strides = array<i32>} : memref<16x128xf32, #tpu.memory_space<vmem>>, vector<1x128xf32>,
    %c0_122 = arith.constant 0 : index
    %c11 = arith.constant 11 : index
    %245 = vector.load %arg2[%c0_122, %c11] : memref<64x16xf32, #tpu.memory_space<vmem>>, vector<32x1xf32>
    %246 = vector.broadcast %245 : vector<32x1xf32> to vector<32x128xf32>
    %247 = arith.mulf %246, %2 : vector<32x128xf32>
    %cst_123 = arith.constant 1.000000e+00 : f32
    %248 = vector.broadcast %cst_123 : f32 to vector<32x128xf32>
    %249 = arith.subf %248, %247 : vector<32x128xf32>
    %250 = math.log %249 : vector<32x128xf32>
    %cst_124 = arith.constant dense<0.000000e+00> : vector<128xf32>
    %251 = vector.multi_reduction <add>, %250, %cst_124 [0] : vector<32x128xf32> to vector<128xf32>
    %252 = vector.shape_cast %251 : vector<128xf32> to vector<1x128xf32>
    %c32_125 = arith.constant 32 : index
    %c11_126 = arith.constant 11 : index
    %253 = vector.load %arg2[%c32_125, %c11_126] : memref<64x16xf32, #tpu.memory_space<vmem>>, vector<32x1xf32>
    %254 = vector.broadcast %253 : vector<32x1xf32> to vector<32x128xf32>
    %255 = arith.mulf %254, %0 : vector<32x128xf32>
    %cst_127 = arith.constant 1.000000e+00 : f32
    %256 = vector.broadcast %cst_127 : f32 to vector<32x128xf32>
    %257 = arith.subf %256, %255 : vector<32x128xf32>
    %258 = math.log %257 : vector<32x128xf32>
    %cst_128 = arith.constant dense<0.000000e+00> : vector<128xf32>
    %259 = vector.multi_reduction <add>, %258, %cst_128 [0] : vector<32x128xf32> to vector<128xf32>
    %260 = vector.shape_cast %259 : vector<128xf32> to vector<1x128xf32>
    %261 = arith.addf %252, %260 : vector<1x128xf32>
    %cst_129 = arith.constant -1.000000e+00 : f32
    %262 = vector.broadcast %cst_129 : f32 to vector<1x128xf32>
    %263 = arith.addf %262, %261 : vector<1x128xf32>
    %cst_130 = arith.constant -1.000000e+00 : f32
    %264 = vector.broadcast %cst_130 : f32 to vector<1x128xf32>
    %265 = arith.divf %264, %263 : vector<1x128xf32>
    %c11_131 = arith.constant 11 : index
    %c0_132 = arith.constant 0 : index
    %266 = vector.load %arg3[%c11_131, %c0_132] : memref<16x128xf32, #tpu.memory_space<vmem>>, vector<1x128xf32>
    tpu.vector_store %arg3[%c11_131, %c0_132], %265 {strides = array<i32>} : memref<16x128xf32, #tpu.memory_space<vmem>>, vector<1x128xf32>,
    %c0_133 = arith.constant 0 : index
    %c12 = arith.constant 12 : index
    %267 = vector.load %arg2[%c0_133, %c12] : memref<64x16xf32, #tpu.memory_space<vmem>>, vector<32x1xf32>
    %268 = vector.broadcast %267 : vector<32x1xf32> to vector<32x128xf32>
    %269 = arith.mulf %268, %2 : vector<32x128xf32>
    %cst_134 = arith.constant 1.000000e+00 : f32
    %270 = vector.broadcast %cst_134 : f32 to vector<32x128xf32>
    %271 = arith.subf %270, %269 : vector<32x128xf32>
    %272 = math.log %271 : vector<32x128xf32>
    %cst_135 = arith.constant dense<0.000000e+00> : vector<128xf32>
    %273 = vector.multi_reduction <add>, %272, %cst_135 [0] : vector<32x128xf32> to vector<128xf32>
    %274 = vector.shape_cast %273 : vector<128xf32> to vector<1x128xf32>
    %c32_136 = arith.constant 32 : index
    %c12_137 = arith.constant 12 : index
    %275 = vector.load %arg2[%c32_136, %c12_137] : memref<64x16xf32, #tpu.memory_space<vmem>>, vector<32x1xf32>
    %276 = vector.broadcast %275 : vector<32x1xf32> to vector<32x128xf32>
    %277 = arith.mulf %276, %0 : vector<32x128xf32>
    %cst_138 = arith.constant 1.000000e+00 : f32
    %278 = vector.broadcast %cst_138 : f32 to vector<32x128xf32>
    %279 = arith.subf %278, %277 : vector<32x128xf32>
    %280 = math.log %279 : vector<32x128xf32>
    %cst_139 = arith.constant dense<0.000000e+00> : vector<128xf32>
    %281 = vector.multi_reduction <add>, %280, %cst_139 [0] : vector<32x128xf32> to vector<128xf32>
    %282 = vector.shape_cast %281 : vector<128xf32> to vector<1x128xf32>
    %283 = arith.addf %274, %282 : vector<1x128xf32>
    %cst_140 = arith.constant -1.000000e+00 : f32
    %284 = vector.broadcast %cst_140 : f32 to vector<1x128xf32>
    %285 = arith.addf %284, %283 : vector<1x128xf32>
    %cst_141 = arith.constant -1.000000e+00 : f32
    %286 = vector.broadcast %cst_141 : f32 to vector<1x128xf32>
    %287 = arith.divf %286, %285 : vector<1x128xf32>
    %c12_142 = arith.constant 12 : index
    %c0_143 = arith.constant 0 : index
    %288 = vector.load %arg3[%c12_142, %c0_143] : memref<16x128xf32, #tpu.memory_space<vmem>>, vector<1x128xf32>
    tpu.vector_store %arg3[%c12_142, %c0_143], %287 {strides = array<i32>} : memref<16x128xf32, #tpu.memory_space<vmem>>, vector<1x128xf32>,
    %c0_144 = arith.constant 0 : index
    %c13 = arith.constant 13 : index
    %289 = vector.load %arg2[%c0_144, %c13] : memref<64x16xf32, #tpu.memory_space<vmem>>, vector<32x1xf32>
    %290 = vector.broadcast %289 : vector<32x1xf32> to vector<32x128xf32>
    %291 = arith.mulf %290, %2 : vector<32x128xf32>
    %cst_145 = arith.constant 1.000000e+00 : f32
    %292 = vector.broadcast %cst_145 : f32 to vector<32x128xf32>
    %293 = arith.subf %292, %291 : vector<32x128xf32>
    %294 = math.log %293 : vector<32x128xf32>
    %cst_146 = arith.constant dense<0.000000e+00> : vector<128xf32>
    %295 = vector.multi_reduction <add>, %294, %cst_146 [0] : vector<32x128xf32> to vector<128xf32>
    %296 = vector.shape_cast %295 : vector<128xf32> to vector<1x128xf32>
    %c32_147 = arith.constant 32 : index
    %c13_148 = arith.constant 13 : index
    %297 = vector.load %arg2[%c32_147, %c13_148] : memref<64x16xf32, #tpu.memory_space<vmem>>, vector<32x1xf32>
    %298 = vector.broadcast %297 : vector<32x1xf32> to vector<32x128xf32>
    %299 = arith.mulf %298, %0 : vector<32x128xf32>
    %cst_149 = arith.constant 1.000000e+00 : f32
    %300 = vector.broadcast %cst_149 : f32 to vector<32x128xf32>
    %301 = arith.subf %300, %299 : vector<32x128xf32>
    %302 = math.log %301 : vector<32x128xf32>
    %cst_150 = arith.constant dense<0.000000e+00> : vector<128xf32>
    %303 = vector.multi_reduction <add>, %302, %cst_150 [0] : vector<32x128xf32> to vector<128xf32>
    %304 = vector.shape_cast %303 : vector<128xf32> to vector<1x128xf32>
    %305 = arith.addf %296, %304 : vector<1x128xf32>
    %cst_151 = arith.constant -1.000000e+00 : f32
    %306 = vector.broadcast %cst_151 : f32 to vector<1x128xf32>
    %307 = arith.addf %306, %305 : vector<1x128xf32>
    %cst_152 = arith.constant -1.000000e+00 : f32
    %308 = vector.broadcast %cst_152 : f32 to vector<1x128xf32>
    %309 = arith.divf %308, %307 : vector<1x128xf32>
    %c13_153 = arith.constant 13 : index
    %c0_154 = arith.constant 0 : index
    %310 = vector.load %arg3[%c13_153, %c0_154] : memref<16x128xf32, #tpu.memory_space<vmem>>, vector<1x128xf32>
    tpu.vector_store %arg3[%c13_153, %c0_154], %309 {strides = array<i32>} : memref<16x128xf32, #tpu.memory_space<vmem>>, vector<1x128xf32>,
    %c0_155 = arith.constant 0 : index
    %c14 = arith.constant 14 : index
    %311 = vector.load %arg2[%c0_155, %c14] : memref<64x16xf32, #tpu.memory_space<vmem>>, vector<32x1xf32>
    %312 = vector.broadcast %311 : vector<32x1xf32> to vector<32x128xf32>
    %313 = arith.mulf %312, %2 : vector<32x128xf32>
    %cst_156 = arith.constant 1.000000e+00 : f32
    %314 = vector.broadcast %cst_156 : f32 to vector<32x128xf32>
    %315 = arith.subf %314, %313 : vector<32x128xf32>
    %316 = math.log %315 : vector<32x128xf32>
    %cst_157 = arith.constant dense<0.000000e+00> : vector<128xf32>
    %317 = vector.multi_reduction <add>, %316, %cst_157 [0] : vector<32x128xf32> to vector<128xf32>
    %318 = vector.shape_cast %317 : vector<128xf32> to vector<1x128xf32>
    %c32_158 = arith.constant 32 : index
    %c14_159 = arith.constant 14 : index
    %319 = vector.load %arg2[%c32_158, %c14_159] : memref<64x16xf32, #tpu.memory_space<vmem>>, vector<32x1xf32>
    %320 = vector.broadcast %319 : vector<32x1xf32> to vector<32x128xf32>
    %321 = arith.mulf %320, %0 : vector<32x128xf32>
    %cst_160 = arith.constant 1.000000e+00 : f32
    %322 = vector.broadcast %cst_160 : f32 to vector<32x128xf32>
    %323 = arith.subf %322, %321 : vector<32x128xf32>
    %324 = math.log %323 : vector<32x128xf32>
    %cst_161 = arith.constant dense<0.000000e+00> : vector<128xf32>
    %325 = vector.multi_reduction <add>, %324, %cst_161 [0] : vector<32x128xf32> to vector<128xf32>
    %326 = vector.shape_cast %325 : vector<128xf32> to vector<1x128xf32>
    %327 = arith.addf %318, %326 : vector<1x128xf32>
    %cst_162 = arith.constant -1.000000e+00 : f32
    %328 = vector.broadcast %cst_162 : f32 to vector<1x128xf32>
    %329 = arith.addf %328, %327 : vector<1x128xf32>
    %cst_163 = arith.constant -1.000000e+00 : f32
    %330 = vector.broadcast %cst_163 : f32 to vector<1x128xf32>
    %331 = arith.divf %330, %329 : vector<1x128xf32>
    %c14_164 = arith.constant 14 : index
    %c0_165 = arith.constant 0 : index
    %332 = vector.load %arg3[%c14_164, %c0_165] : memref<16x128xf32, #tpu.memory_space<vmem>>, vector<1x128xf32>
    tpu.vector_store %arg3[%c14_164, %c0_165], %331 {strides = array<i32>} : memref<16x128xf32, #tpu.memory_space<vmem>>, vector<1x128xf32>,
    %c0_166 = arith.constant 0 : index
    %c15 = arith.constant 15 : index
    %333 = vector.load %arg2[%c0_166, %c15] : memref<64x16xf32, #tpu.memory_space<vmem>>, vector<32x1xf32>
    %334 = vector.broadcast %333 : vector<32x1xf32> to vector<32x128xf32>
    %335 = arith.mulf %334, %2 : vector<32x128xf32>
    %cst_167 = arith.constant 1.000000e+00 : f32
    %336 = vector.broadcast %cst_167 : f32 to vector<32x128xf32>
    %337 = arith.subf %336, %335 : vector<32x128xf32>
    %338 = math.log %337 : vector<32x128xf32>
    %cst_168 = arith.constant dense<0.000000e+00> : vector<128xf32>
    %339 = vector.multi_reduction <add>, %338, %cst_168 [0] : vector<32x128xf32> to vector<128xf32>
    %340 = vector.shape_cast %339 : vector<128xf32> to vector<1x128xf32>
    %c32_169 = arith.constant 32 : index
    %c15_170 = arith.constant 15 : index
    %341 = vector.load %arg2[%c32_169, %c15_170] : memref<64x16xf32, #tpu.memory_space<vmem>>, vector<32x1xf32>
    %342 = vector.broadcast %341 : vector<32x1xf32> to vector<32x128xf32>
    %343 = arith.mulf %342, %0 : vector<32x128xf32>
    %cst_171 = arith.constant 1.000000e+00 : f32
    %344 = vector.broadcast %cst_171 : f32 to vector<32x128xf32>
    %345 = arith.subf %344, %343 : vector<32x128xf32>
    %346 = math.log %345 : vector<32x128xf32>
    %cst_172 = arith.constant dense<0.000000e+00> : vector<128xf32>
    %347 = vector.multi_reduction <add>, %346, %cst_172 [0] : vector<32x128xf32> to vector<128xf32>
    %348 = vector.shape_cast %347 : vector<128xf32> to vector<1x128xf32>
    %349 = arith.addf %340, %348 : vector<1x128xf32>
    %cst_173 = arith.constant -1.000000e+00 : f32
    %350 = vector.broadcast %cst_173 : f32 to vector<1x128xf32>
    %351 = arith.addf %350, %349 : vector<1x128xf32>
    %cst_174 = arith.constant -1.000000e+00 : f32
    %352 = vector.broadcast %cst_174 : f32 to vector<1x128xf32>
    %353 = arith.divf %352, %351 : vector<1x128xf32>
    %c15_175 = arith.constant 15 : index
    %c0_176 = arith.constant 0 : index
    %354 = vector.load %arg3[%c15_175, %c0_176] : memref<16x128xf32, #tpu.memory_space<vmem>>, vector<1x128xf32>
    tpu.vector_store %arg3[%c15_175, %c0_176], %353 {strides = array<i32>} : memref<16x128xf32, #tpu.memory_space<vmem>>, vector<1x128xf32>,
    return
  }
  func.func @transform_0(%arg0: i32) -> (i32, i32) {
    %c0_i32 = arith.constant 0 : i32
    %c0_i32_0 = arith.constant 0 : i32
    return %c0_i32, %arg0 : i32, i32
  }
  func.func @transform_1(%arg0: i32) -> (i32, i32) {
    %c0_i32 = arith.constant 0 : i32
    %c0_i32_0 = arith.constant 0 : i32
    %c0_i32_1 = arith.constant 0 : i32
    return %c0_i32, %c0_i32_0 : i32, i32
  }
  func.func @transform_2(%arg0: i32) -> (i32, i32) {
    %c0_i32 = arith.constant 0 : i32
    %c0_i32_0 = arith.constant 0 : i32
    return %c0_i32, %arg0 : i32, i32
  }
}

</mosaic_0001>

<llo_original>
// kernel: tpu_custom_call.1
$region0: #{tpu_custom_call.1}
  #allocation0 [shape = 'u32[]', space=smem, size = 0x4, offset = 0x4, fixed_abs, tag = 'smem constant byte address 0x4 - core index']
  #allocation1 [shape = 'u32[144,128]{1,0:T(1,128)}', space=vmem, size = 0x12000, scoped, tag = 'internal scratch']
  %s0 = inlined_call_operand.vmem [shape: f32[32,128], index: 0, kind: input, shape index: {}]
  %s1 = inlined_call_operand.vmem [shape: f32[64,16], index: 1, kind: input, shape index: {}]
  %s2 = inlined_call_operand.hbm [shape: f32[16,128], index: 2, kind: output, shape index: {}]
  %s3 = sld [smem:[#allocation0]]
  $region18: #{tpu_custom_call.1} parent=0
    _
  %s5 = ssub.s32 1, %s3
  %s6 = scalar_select 0, %s5, %s3
  $region1: #{tpu_custom_call.1} parent=0
    #allocation2 [shape = 'u8[8192]{0}', space=vmem, size = 0x2000, scoped, tag = 'output window, operand 0, single buffered']
    #allocation3 [shape = 's32[1]{0}', space=sflag, size = 0x4, scoped, tag = 'scoped memory for tpu_custom_call.1']
    %7 = vsyncpa [#allocation3], 0
    // Predicated region
    $region2: #{tpu_custom_call.1} parent=1 // pred_check
      _
    $region3: #{tpu_custom_call.1} parent=1 // pred_check_branch
      %9 = sbr.rel (0) target = $region5
    $region4: #{tpu_custom_call.1} parent=1 // pred_region
      _
    $region5: #{tpu_custom_call.1} parent=1 // pred_fallthru
      _
    // Predicated region
    $region6: #{tpu_custom_call.1} parent=1 // pred_check
      _
    $region7: #{tpu_custom_call.1} parent=1 // pred_check_branch
      %11 = sbr.rel (0) target = $region9
    $region8: #{tpu_custom_call.1} parent=1 // pred_region
      _
    $region9: #{tpu_custom_call.1} parent=1 // pred_fallthru
      _
    %v12 = vld [vmem:[%s0] sm:$0xff]
    %v13 = vld [vmem:[%s0 + $0x8] sm:$0xff]
    %v14 = vld [vmem:[%s0 + $0x10] sm:$0xff]
    %v15 = vld [vmem:[%s0 + $0x18] sm:$0xff]
    %v16 = vsub.f32 1.0, %v12
    %v17 = vsub.f32 1.0, %v13
    %v18 = vsub.f32 1.0, %v14
    %v19 = vsub.f32 1.0, %v15
    %v20 = vld [vmem:[%s1] sm:$0xff]
    %v21 = vld [vmem:[%s1 + $0x8] sm:$0xff]
    %v22 = vld [vmem:[%s1 + $0x10] sm:$0xff]
    %v23 = vld [vmem:[%s1 + $0x18] sm:$0xff]
    %25 = vset.pattern.permute.xlu0 0
    %26 = vperm.xlu0 %25, %v20
    %v27 = vpop.permute.xlu0 %26
    %30 = vset.pattern.permute.xlu0 0
    %31 = vperm.xlu0 %30, %v21
    %v32 = vpop.permute.xlu0 %31
    %35 = vset.pattern.permute.xlu0 0
    %36 = vperm.xlu0 %35, %v22
    %v37 = vpop.permute.xlu0 %36
    %40 = vset.pattern.permute.xlu0 0
    %41 = vperm.xlu0 %40, %v23
    %v42 = vpop.permute.xlu0 %41
    %v44 = vmul.f32 %v27, %v16
    %v45 = vmul.f32 %v32, %v17
    %v46 = vmul.f32 %v37, %v18
    %v47 = vmul.f32 %v42, %v19
    %v48 = vsub.f32 1.0, %v44
    %v49 = vsub.f32 1.0, %v45
    %v50 = vsub.f32 1.0, %v46
    %v51 = vsub.f32 1.0, %v47
    %v52 = vlog2.pop %v48
    %v53 = vmul.f32 %v52, 0.6931472
    %v54 = vlog2.pop %v49
    %v55 = vmul.f32 %v54, 0.6931472
    %v56 = vlog2.pop %v50
    %v57 = vmul.f32 %v56, 0.6931472
    %v58 = vlog2.pop %v51
    %v59 = vmul.f32 %v58, 0.6931472
    %v60 = vadd.f32 %v53, %v55
    %v61 = vadd.f32 %v60, %v57
    %v62 = vadd.f32 %v61, %v59
    %v63 = vrot.slane %v62, 4
    %v64 = vadd.f32 %v62, %v63
    %v65 = vrot.slane %v64, 2
    %v66 = vadd.f32 %v64, %v65
    %v67 = vrot.slane %v66, 1
    %v68 = vadd.f32 %v66, %v67
    %v69 = vld [vmem:[%s1 + $0x20] sm:$0xff]
    %v70 = vld [vmem:[%s1 + $0x28] sm:$0xff]
    %v71 = vld [vmem:[%s1 + $0x30] sm:$0xff]
    %v72 = vld [vmem:[%s1 + $0x38] sm:$0xff]
    %74 = vset.pattern.permute.xlu0 0
    %75 = vperm.xlu0 %74, %v69
    %v76 = vpop.permute.xlu0 %75
    %79 = vset.pattern.permute.xlu0 0
    %80 = vperm.xlu0 %79, %v70
    %v81 = vpop.permute.xlu0 %80
    %84 = vset.pattern.permute.xlu0 0
    %85 = vperm.xlu0 %84, %v71
    %v86 = vpop.permute.xlu0 %85
    %89 = vset.pattern.permute.xlu0 0
    %90 = vperm.xlu0 %89, %v72
    %v91 = vpop.permute.xlu0 %90
    %v93 = vmul.f32 %v76, %v12
    %v94 = vmul.f32 %v81, %v13
    %v95 = vmul.f32 %v86, %v14
    %v96 = vmul.f32 %v91, %v15
    %v97 = vsub.f32 1.0, %v93
    %v98 = vsub.f32 1.0, %v94
    %v99 = vsub.f32 1.0, %v95
    %v100 = vsub.f32 1.0, %v96
    %v101 = vlog2.pop %v97
    %v102 = vmul.f32 %v101, 0.6931472
    %v103 = vlog2.pop %v98
    %v104 = vmul.f32 %v103, 0.6931472
    %v105 = vlog2.pop %v99
    %v106 = vmul.f32 %v105, 0.6931472
    %v107 = vlog2.pop %v100
    %v108 = vmul.f32 %v107, 0.6931472
    %v109 = vadd.f32 %v102, %v104
    %v110 = vadd.f32 %v109, %v106
    %v111 = vadd.f32 %v110, %v108
    %v112 = vrot.slane %v111, 4
    %v113 = vadd.f32 %v111, %v112
    %v114 = vrot.slane %v113, 2
    %v115 = vadd.f32 %v113, %v114
    %v116 = vrot.slane %v115, 1
    %v117 = vadd.f32 %v115, %v116
    %v118 = vadd.f32 %v68, %v117
    %v119 = vadd.f32 %v118, -1.0
    %v120 = vrcp.pop %v119
    %v121 = vmul.f32 -1.0, %v120
    %122 = vst [vmem:[#allocation2] sm:$0x1] %v121
    %v123 = vld [vmem:[%s1] sm:$0xff]
    %v124 = vld [vmem:[%s1 + $0x8] sm:$0xff]
    %v125 = vld [vmem:[%s1 + $0x10] sm:$0xff]
    %v126 = vld [vmem:[%s1 + $0x18] sm:$0xff]
    %128 = vset.pattern.permute.xlu0 1
    %129 = vperm.xlu0 %128, %v123
    %v130 = vpop.permute.xlu0 %129
    %133 = vset.pattern.permute.xlu0 1
    %134 = vperm.xlu0 %133, %v124
    %v135 = vpop.permute.xlu0 %134
    %138 = vset.pattern.permute.xlu0 1
    %139 = vperm.xlu0 %138, %v125
    %v140 = vpop.permute.xlu0 %139
    %143 = vset.pattern.permute.xlu0 1
    %144 = vperm.xlu0 %143, %v126
    %v145 = vpop.permute.xlu0 %144
    %v147 = vmul.f32 %v130, %v16
    %v148 = vmul.f32 %v135, %v17
    %v149 = vmul.f32 %v140, %v18
    %v150 = vmul.f32 %v145, %v19
    %v151 = vsub.f32 1.0, %v147
    %v152 = vsub.f32 1.0, %v148
    %v153 = vsub.f32 1.0, %v149
    %v154 = vsub.f32 1.0, %v150
    %v155 = vlog2.pop %v151
    %v156 = vmul.f32 %v155, 0.6931472
    %v157 = vlog2.pop %v152
    %v158 = vmul.f32 %v157, 0.6931472
    %v159 = vlog2.pop %v153
    %v160 = vmul.f32 %v159, 0.6931472
    %v161 = vlog2.pop %v154
    %v162 = vmul.f32 %v161, 0.6931472
    %v163 = vadd.f32 %v156, %v158
    %v164 = vadd.f32 %v163, %v160
    %v165 = vadd.f32 %v164, %v162
    %v166 = vrot.slane %v165, 4
    %v167 = vadd.f32 %v165, %v166
    %v168 = vrot.slane %v167, 2
    %v169 = vadd.f32 %v167, %v168
    %v170 = vrot.slane %v169, 1
    %v171 = vadd.f32 %v169, %v170
    %v172 = vld [vmem:[%s1 + $0x20] sm:$0xff]
    %v173 = vld [vmem:[%s1 + $0x28] sm:$0xff]
    %v174 = vld [vmem:[%s1 + $0x30] sm:$0xff]
    %v175 = vld [vmem:[%s1 + $0x38] sm:$0xff]
    %177 = vset.pattern.permute.xlu0 1
    %178 = vperm.xlu0 %177, %v172
    %v179 = vpop.permute.xlu0 %178
    %182 = vset.pattern.permute.xlu0 1
    %183 = vperm.xlu0 %182, %v173
    %v184 = vpop.permute.xlu0 %183
    %187 = vset.pattern.permute.xlu0 1
    %188 = vperm.xlu0 %187, %v174
    %v189 = vpop.permute.xlu0 %188
    %192 = vset.pattern.permute.xlu0 1
    %193 = vperm.xlu0 %192, %v175
    %v194 = vpop.permute.xlu0 %193
    %v196 = vmul.f32 %v179, %v12
    %v197 = vmul.f32 %v184, %v13
    %v198 = vmul.f32 %v189, %v14
    %v199 = vmul.f32 %v194, %v15
    %v200 = vsub.f32 1.0, %v196
    %v201 = vsub.f32 1.0, %v197
    %v202 = vsub.f32 1.0, %v198
    %v203 = vsub.f32 1.0, %v199
    %v204 = vlog2.pop %v200
    %v205 = vmul.f32 %v204, 0.6931472
    %v206 = vlog2.pop %v201
    %v207 = vmul.f32 %v206, 0.6931472
    %v208 = vlog2.pop %v202
    %v209 = vmul.f32 %v208, 0.6931472
    %v210 = vlog2.pop %v203
    %v211 = vmul.f32 %v210, 0.6931472
    %v212 = vadd.f32 %v205, %v207
    %v213 = vadd.f32 %v212, %v209
    %v214 = vadd.f32 %v213, %v211
    %v215 = vrot.slane %v214, 4
    %v216 = vadd.f32 %v214, %v215
    %v217 = vrot.slane %v216, 2
    %v218 = vadd.f32 %v216, %v217
    %v219 = vrot.slane %v218, 1
    %v220 = vadd.f32 %v218, %v219
    %v221 = vadd.f32 %v171, %v220
    %v222 = vadd.f32 %v221, -1.0
    %v223 = vrcp.pop %v222
    %v224 = vmul.f32 -1.0, %v223
    %225 = vst [vmem:[#allocation2 + $0x1] sm:$0x1] %v224
    %v226 = vld [vmem:[%s1] sm:$0xff]
    %v227 = vld [vmem:[%s1 + $0x8] sm:$0xff]
    %v228 = vld [vmem:[%s1 + $0x10] sm:$0xff]
    %v229 = vld [vmem:[%s1 + $0x18] sm:$0xff]
    %231 = vset.pattern.permute.xlu0 2
    %232 = vperm.xlu0 %231, %v226
    %v233 = vpop.permute.xlu0 %232
    %236 = vset.pattern.permute.xlu0 2
    %237 = vperm.xlu0 %236, %v227
    %v238 = vpop.permute.xlu0 %237
    %241 = vset.pattern.permute.xlu0 2
    %242 = vperm.xlu0 %241, %v228
    %v243 = vpop.permute.xlu0 %242
    %246 = vset.pattern.permute.xlu0 2
    %247 = vperm.xlu0 %246, %v229
    %v248 = vpop.permute.xlu0 %247
    %v250 = vmul.f32 %v233, %v16
    %v251 = vmul.f32 %v238, %v17
    %v252 = vmul.f32 %v243, %v18
    %v253 = vmul.f32 %v248, %v19
    %v254 = vsub.f32 1.0, %v250
    %v255 = vsub.f32 1.0, %v251
    %v256 = vsub.f32 1.0, %v252
    %v257 = vsub.f32 1.0, %v253
    %v258 = vlog2.pop %v254
    %v259 = vmul.f32 %v258, 0.6931472
    %v260 = vlog2.pop %v255
    %v261 = vmul.f32 %v260, 0.6931472
    %v262 = vlog2.pop %v256
    %v263 = vmul.f32 %v262, 0.6931472
    %v264 = vlog2.pop %v257
    %v265 = vmul.f32 %v264, 0.6931472
    %v266 = vadd.f32 %v259, %v261
    %v267 = vadd.f32 %v266, %v263
    %v268 = vadd.f32 %v267, %v265
    %v269 = vrot.slane %v268, 4
    %v270 = vadd.f32 %v268, %v269
    %v271 = vrot.slane %v270, 2
    %v272 = vadd.f32 %v270, %v271
    %v273 = vrot.slane %v272, 1
    %v274 = vadd.f32 %v272, %v273
    %v275 = vld [vmem:[%s1 + $0x20] sm:$0xff]
    %v276 = vld [vmem:[%s1 + $0x28] sm:$0xff]
    %v277 = vld [vmem:[%s1 + $0x30] sm:$0xff]
    %v278 = vld [vmem:[%s1 + $0x38] sm:$0xff]
    %280 = vset.pattern.permute.xlu0 2
    %281 = vperm.xlu0 %280, %v275
    %v282 = vpop.permute.xlu0 %281
    %285 = vset.pattern.permute.xlu0 2
    %286 = vperm.xlu0 %285, %v276
    %v287 = vpop.permute.xlu0 %286
    %290 = vset.pattern.permute.xlu0 2
    %291 = vperm.xlu0 %290, %v277
    %v292 = vpop.permute.xlu0 %291
    %295 = vset.pattern.permute.xlu0 2
    %296 = vperm.xlu0 %295, %v278
    %v297 = vpop.permute.xlu0 %296
    %v299 = vmul.f32 %v282, %v12
    %v300 = vmul.f32 %v287, %v13
    %v301 = vmul.f32 %v292, %v14
    %v302 = vmul.f32 %v297, %v15
    %v303 = vsub.f32 1.0, %v299
    %v304 = vsub.f32 1.0, %v300
    %v305 = vsub.f32 1.0, %v301
    %v306 = vsub.f32 1.0, %v302
    %v307 = vlog2.pop %v303
    %v308 = vmul.f32 %v307, 0.6931472
    %v309 = vlog2.pop %v304
    %v310 = vmul.f32 %v309, 0.6931472
    %v311 = vlog2.pop %v305
    %v312 = vmul.f32 %v311, 0.6931472
    %v313 = vlog2.pop %v306
    %v314 = vmul.f32 %v313, 0.6931472
    %v315 = vadd.f32 %v308, %v310
    %v316 = vadd.f32 %v315, %v312
    %v317 = vadd.f32 %v316, %v314
    %v318 = vrot.slane %v317, 4
    %v319 = vadd.f32 %v317, %v318
    %v320 = vrot.slane %v319, 2
    %v321 = vadd.f32 %v319, %v320
    %v322 = vrot.slane %v321, 1
    %v323 = vadd.f32 %v321, %v322
    %v324 = vadd.f32 %v274, %v323
    %v325 = vadd.f32 %v324, -1.0
    %v326 = vrcp.pop %v325
    %v327 = vmul.f32 -1.0, %v326
    %328 = vst [vmem:[#allocation2 + $0x2] sm:$0x1] %v327
    %v329 = vld [vmem:[%s1] sm:$0xff]
    %v330 = vld [vmem:[%s1 + $0x8] sm:$0xff]
    %v331 = vld [vmem:[%s1 + $0x10] sm:$0xff]
    %v332 = vld [vmem:[%s1 + $0x18] sm:$0xff]
    %334 = vset.pattern.permute.xlu0 3
    %335 = vperm.xlu0 %334, %v329
    %v336 = vpop.permute.xlu0 %335
    %339 = vset.pattern.permute.xlu0 3
    %340 = vperm.xlu0 %339, %v330
    %v341 = vpop.permute.xlu0 %340
    %344 = vset.pattern.permute.xlu0 3
    %345 = vperm.xlu0 %344, %v331
    %v346 = vpop.permute.xlu0 %345
    %349 = vset.pattern.permute.xlu0 3
    %350 = vperm.xlu0 %349, %v332
    %v351 = vpop.permute.xlu0 %350
    %v353 = vmul.f32 %v336, %v16
    %v354 = vmul.f32 %v341, %v17
    %v355 = vmul.f32 %v346, %v18
    %v356 = vmul.f32 %v351, %v19
    %v357 = vsub.f32 1.0, %v353
    %v358 = vsub.f32 1.0, %v354
    %v359 = vsub.f32 1.0, %v355
    %v360 = vsub.f32 1.0, %v356
    %v361 = vlog2.pop %v357
    %v362 = vmul.f32 %v361, 0.6931472
    %v363 = vlog2.pop %v358
    %v364 = vmul.f32 %v363, 0.6931472
    %v365 = vlog2.pop %v359
    %v366 = vmul.f32 %v365, 0.6931472
    %v367 = vlog2.pop %v360
    %v368 = vmul.f32 %v367, 0.6931472
    %v369 = vadd.f32 %v362, %v364
    %v370 = vadd.f32 %v369, %v366
    %v371 = vadd.f32 %v370, %v368
    %v372 = vrot.slane %v371, 4
    %v373 = vadd.f32 %v371, %v372
    %v374 = vrot.slane %v373, 2
    %v375 = vadd.f32 %v373, %v374
    %v376 = vrot.slane %v375, 1
    %v377 = vadd.f32 %v375, %v376
    %v378 = vld [vmem:[%s1 + $0x20] sm:$0xff]
    %v379 = vld [vmem:[%s1 + $0x28] sm:$0xff]
    %v380 = vld [vmem:[%s1 + $0x30] sm:$0xff]
    %v381 = vld [vmem:[%s1 + $0x38] sm:$0xff]
    %383 = vset.pattern.permute.xlu0 3
    %384 = vperm.xlu0 %383, %v378
    %v385 = vpop.permute.xlu0 %384
    %388 = vset.pattern.permute.xlu0 3
    %389 = vperm.xlu0 %388, %v379
    %v390 = vpop.permute.xlu0 %389
    %393 = vset.pattern.permute.xlu0 3
    %394 = vperm.xlu0 %393, %v380
    %v395 = vpop.permute.xlu0 %394
    %398 = vset.pattern.permute.xlu0 3
    %399 = vperm.xlu0 %398, %v381
    %v400 = vpop.permute.xlu0 %399
    %v402 = vmul.f32 %v385, %v12
    %v403 = vmul.f32 %v390, %v13
    %v404 = vmul.f32 %v395, %v14
    %v405 = vmul.f32 %v400, %v15
    %v406 = vsub.f32 1.0, %v402
    %v407 = vsub.f32 1.0, %v403
    %v408 = vsub.f32 1.0, %v404
    %v409 = vsub.f32 1.0, %v405
    %v410 = vlog2.pop %v406
    %v411 = vmul.f32 %v410, 0.6931472
    %v412 = vlog2.pop %v407
    %v413 = vmul.f32 %v412, 0.6931472
    %v414 = vlog2.pop %v408
    %v415 = vmul.f32 %v414, 0.6931472
    %v416 = vlog2.pop %v409
    %v417 = vmul.f32 %v416, 0.6931472
    %v418 = vadd.f32 %v411, %v413
    %v419 = vadd.f32 %v418, %v415
    %v420 = vadd.f32 %v419, %v417
    %v421 = vrot.slane %v420, 4
    %v422 = vadd.f32 %v420, %v421
    %v423 = vrot.slane %v422, 2
    %v424 = vadd.f32 %v422, %v423
    %v425 = vrot.slane %v424, 1
    %v426 = vadd.f32 %v424, %v425
    %v427 = vadd.f32 %v377, %v426
    %v428 = vadd.f32 %v427, -1.0
    %v429 = vrcp.pop %v428
    %v430 = vmul.f32 -1.0, %v429
    %431 = vst [vmem:[#allocation2 + $0x3] sm:$0x1] %v430
    %v432 = vld [vmem:[%s1] sm:$0xff]
    %v433 = vld [vmem:[%s1 + $0x8] sm:$0xff]
    %v434 = vld [vmem:[%s1 + $0x10] sm:$0xff]
    %v435 = vld [vmem:[%s1 + $0x18] sm:$0xff]
    %437 = vset.pattern.permute.xlu0 4
    %438 = vperm.xlu0 %437, %v432
    %v439 = vpop.permute.xlu0 %438
    %442 = vset.pattern.permute.xlu0 4
    %443 = vperm.xlu0 %442, %v433
    %v444 = vpop.permute.xlu0 %443
    %447 = vset.pattern.permute.xlu0 4
    %448 = vperm.xlu0 %447, %v434
    %v449 = vpop.permute.xlu0 %448
    %452 = vset.pattern.permute.xlu0 4
    %453 = vperm.xlu0 %452, %v435
    %v454 = vpop.permute.xlu0 %453
    %v456 = vmul.f32 %v439, %v16
    %v457 = vmul.f32 %v444, %v17
    %v458 = vmul.f32 %v449, %v18
    %v459 = vmul.f32 %v454, %v19
    %v460 = vsub.f32 1.0, %v456
    %v461 = vsub.f32 1.0, %v457
    %v462 = vsub.f32 1.0, %v458
    %v463 = vsub.f32 1.0, %v459
    %v464 = vlog2.pop %v460
    %v465 = vmul.f32 %v464, 0.6931472
    %v466 = vlog2.pop %v461
    %v467 = vmul.f32 %v466, 0.6931472
    %v468 = vlog2.pop %v462
    %v469 = vmul.f32 %v468, 0.6931472
    %v470 = vlog2.pop %v463
    %v471 = vmul.f32 %v470, 0.6931472
    %v472 = vadd.f32 %v465, %v467
    %v473 = vadd.f32 %v472, %v469
    %v474 = vadd.f32 %v473, %v471
    %v475 = vrot.slane %v474, 4
    %v476 = vadd.f32 %v474, %v475
    %v477 = vrot.slane %v476, 2
    %v478 = vadd.f32 %v476, %v477
    %v479 = vrot.slane %v478, 1
    %v480 = vadd.f32 %v478, %v479
    %v481 = vld [vmem:[%s1 + $0x20] sm:$0xff]
    %v482 = vld [vmem:[%s1 + $0x28] sm:$0xff]
    %v483 = vld [vmem:[%s1 + $0x30] sm:$0xff]
    %v484 = vld [vmem:[%s1 + $0x38] sm:$0xff]
    %486 = vset.pattern.permute.xlu0 4
    %487 = vperm.xlu0 %486, %v481
    %v488 = vpop.permute.xlu0 %487
    %491 = vset.pattern.permute.xlu0 4
    %492 = vperm.xlu0 %491, %v482
    %v493 = vpop.permute.xlu0 %492
    %496 = vset.pattern.permute.xlu0 4
    %497 = vperm.xlu0 %496, %v483
    %v498 = vpop.permute.xlu0 %497
    %501 = vset.pattern.permute.xlu0 4
    %502 = vperm.xlu0 %501, %v484
    %v503 = vpop.permute.xlu0 %502
    %v505 = vmul.f32 %v488, %v12
    %v506 = vmul.f32 %v493, %v13
    %v507 = vmul.f32 %v498, %v14
    %v508 = vmul.f32 %v503, %v15
    %v509 = vsub.f32 1.0, %v505
    %v510 = vsub.f32 1.0, %v506
    %v511 = vsub.f32 1.0, %v507
    %v512 = vsub.f32 1.0, %v508
    %v513 = vlog2.pop %v509
    %v514 = vmul.f32 %v513, 0.6931472
    %v515 = vlog2.pop %v510
    %v516 = vmul.f32 %v515, 0.6931472
    %v517 = vlog2.pop %v511
    %v518 = vmul.f32 %v517, 0.6931472
    %v519 = vlog2.pop %v512
    %v520 = vmul.f32 %v519, 0.6931472
    %v521 = vadd.f32 %v514, %v516
    %v522 = vadd.f32 %v521, %v518
    %v523 = vadd.f32 %v522, %v520
    %v524 = vrot.slane %v523, 4
    %v525 = vadd.f32 %v523, %v524
    %v526 = vrot.slane %v525, 2
    %v527 = vadd.f32 %v525, %v526
    %v528 = vrot.slane %v527, 1
    %v529 = vadd.f32 %v527, %v528
    %v530 = vadd.f32 %v480, %v529
    %v531 = vadd.f32 %v530, -1.0
    %v532 = vrcp.pop %v531
    %v533 = vmul.f32 -1.0, %v532
    %534 = vst [vmem:[#allocation2 + $0x4] sm:$0x1] %v533
    %v535 = vld [vmem:[%s1] sm:$0xff]
    %v536 = vld [vmem:[%s1 + $0x8] sm:$0xff]
    %v537 = vld [vmem:[%s1 + $0x10] sm:$0xff]
    %v538 = vld [vmem:[%s1 + $0x18] sm:$0xff]
    %540 = vset.pattern.permute.xlu0 5
    %541 = vperm.xlu0 %540, %v535
    %v542 = vpop.permute.xlu0 %541
    %545 = vset.pattern.permute.xlu0 5
    %546 = vperm.xlu0 %545, %v536
    %v547 = vpop.permute.xlu0 %546
    %550 = vset.pattern.permute.xlu0 5
    %551 = vperm.xlu0 %550, %v537
    %v552 = vpop.permute.xlu0 %551
    %555 = vset.pattern.permute.xlu0 5
    %556 = vperm.xlu0 %555, %v538
    %v557 = vpop.permute.xlu0 %556
    %v559 = vmul.f32 %v542, %v16
    %v560 = vmul.f32 %v547, %v17
    %v561 = vmul.f32 %v552, %v18
    %v562 = vmul.f32 %v557, %v19
    %v563 = vsub.f32 1.0, %v559
    %v564 = vsub.f32 1.0, %v560
    %v565 = vsub.f32 1.0, %v561
    %v566 = vsub.f32 1.0, %v562
    %v567 = vlog2.pop %v563
    %v568 = vmul.f32 %v567, 0.6931472
    %v569 = vlog2.pop %v564
    %v570 = vmul.f32 %v569, 0.6931472
    %v571 = vlog2.pop %v565
    %v572 = vmul.f32 %v571, 0.6931472
    %v573 = vlog2.pop %v566
    %v574 = vmul.f32 %v573, 0.6931472
    %v575 = vadd.f32 %v568, %v570
    %v576 = vadd.f32 %v575, %v572
    %v577 = vadd.f32 %v576, %v574
    %v578 = vrot.slane %v577, 4
    %v579 = vadd.f32 %v577, %v578
    %v580 = vrot.slane %v579, 2
    %v581 = vadd.f32 %v579, %v580
    %v582 = vrot.slane %v581, 1
    %v583 = vadd.f32 %v581, %v582
    %v584 = vld [vmem:[%s1 + $0x20] sm:$0xff]
    %v585 = vld [vmem:[%s1 + $0x28] sm:$0xff]
    %v586 = vld [vmem:[%s1 + $0x30] sm:$0xff]
    %v587 = vld [vmem:[%s1 + $0x38] sm:$0xff]
    %589 = vset.pattern.permute.xlu0 5
    %590 = vperm.xlu0 %589, %v584
    %v591 = vpop.permute.xlu0 %590
    %594 = vset.pattern.permute.xlu0 5
    %595 = vperm.xlu0 %594, %v585
    %v596 = vpop.permute.xlu0 %595
    %599 = vset.pattern.permute.xlu0 5
    %600 = vperm.xlu0 %599, %v586
    %v601 = vpop.permute.xlu0 %600
    %604 = vset.pattern.permute.xlu0 5
    %605 = vperm.xlu0 %604, %v587
    %v606 = vpop.permute.xlu0 %605
    %v608 = vmul.f32 %v591, %v12
    %v609 = vmul.f32 %v596, %v13
    %v610 = vmul.f32 %v601, %v14
    %v611 = vmul.f32 %v606, %v15
    %v612 = vsub.f32 1.0, %v608
    %v613 = vsub.f32 1.0, %v609
    %v614 = vsub.f32 1.0, %v610
    %v615 = vsub.f32 1.0, %v611
    %v616 = vlog2.pop %v612
    %v617 = vmul.f32 %v616, 0.6931472
    %v618 = vlog2.pop %v613
    %v619 = vmul.f32 %v618, 0.6931472
    %v620 = vlog2.pop %v614
    %v621 = vmul.f32 %v620, 0.6931472
    %v622 = vlog2.pop %v615
    %v623 = vmul.f32 %v622, 0.6931472
    %v624 = vadd.f32 %v617, %v619
    %v625 = vadd.f32 %v624, %v621
    %v626 = vadd.f32 %v625, %v623
    %v627 = vrot.slane %v626, 4
    %v628 = vadd.f32 %v626, %v627
    %v629 = vrot.slane %v628, 2
    %v630 = vadd.f32 %v628, %v629
    %v631 = vrot.slane %v630, 1
    %v632 = vadd.f32 %v630, %v631
    %v633 = vadd.f32 %v583, %v632
    %v634 = vadd.f32 %v633, -1.0
    %v635 = vrcp.pop %v634
    %v636 = vmul.f32 -1.0, %v635
    %637 = vst [vmem:[#allocation2 + $0x5] sm:$0x1] %v636
    %v638 = vld [vmem:[%s1] sm:$0xff]
    %v639 = vld [vmem:[%s1 + $0x8] sm:$0xff]
    %v640 = vld [vmem:[%s1 + $0x10] sm:$0xff]
    %v641 = vld [vmem:[%s1 + $0x18] sm:$0xff]
    %643 = vset.pattern.permute.xlu0 6
    %644 = vperm.xlu0 %643, %v638
    %v645 = vpop.permute.xlu0 %644
    %648 = vset.pattern.permute.xlu0 6
    %649 = vperm.xlu0 %648, %v639
    %v650 = vpop.permute.xlu0 %649
    %653 = vset.pattern.permute.xlu0 6
    %654 = vperm.xlu0 %653, %v640
    %v655 = vpop.permute.xlu0 %654
    %658 = vset.pattern.permute.xlu0 6
    %659 = vperm.xlu0 %658, %v641
    %v660 = vpop.permute.xlu0 %659
    %v662 = vmul.f32 %v645, %v16
    %v663 = vmul.f32 %v650, %v17
    %v664 = vmul.f32 %v655, %v18
    %v665 = vmul.f32 %v660, %v19
    %v666 = vsub.f32 1.0, %v662
    %v667 = vsub.f32 1.0, %v663
    %v668 = vsub.f32 1.0, %v664
    %v669 = vsub.f32 1.0, %v665
    %v670 = vlog2.pop %v666
    %v671 = vmul.f32 %v670, 0.6931472
    %v672 = vlog2.pop %v667
    %v673 = vmul.f32 %v672, 0.6931472
    %v674 = vlog2.pop %v668
    %v675 = vmul.f32 %v674, 0.6931472
    %v676 = vlog2.pop %v669
    %v677 = vmul.f32 %v676, 0.6931472
    %v678 = vadd.f32 %v671, %v673
    %v679 = vadd.f32 %v678, %v675
    %v680 = vadd.f32 %v679, %v677
    %v681 = vrot.slane %v680, 4
    %v682 = vadd.f32 %v680, %v681
    %v683 = vrot.slane %v682, 2
    %v684 = vadd.f32 %v682, %v683
    %v685 = vrot.slane %v684, 1
    %v686 = vadd.f32 %v684, %v685
    %v687 = vld [vmem:[%s1 + $0x20] sm:$0xff]
    %v688 = vld [vmem:[%s1 + $0x28] sm:$0xff]
    %v689 = vld [vmem:[%s1 + $0x30] sm:$0xff]
    %v690 = vld [vmem:[%s1 + $0x38] sm:$0xff]
    %692 = vset.pattern.permute.xlu0 6
    %693 = vperm.xlu0 %692, %v687
    %v694 = vpop.permute.xlu0 %693
    %697 = vset.pattern.permute.xlu0 6
    %698 = vperm.xlu0 %697, %v688
    %v699 = vpop.permute.xlu0 %698
    %702 = vset.pattern.permute.xlu0 6
    %703 = vperm.xlu0 %702, %v689
    %v704 = vpop.permute.xlu0 %703
    %707 = vset.pattern.permute.xlu0 6
    %708 = vperm.xlu0 %707, %v690
    %v709 = vpop.permute.xlu0 %708
    %v711 = vmul.f32 %v694, %v12
    %v712 = vmul.f32 %v699, %v13
    %v713 = vmul.f32 %v704, %v14
    %v714 = vmul.f32 %v709, %v15
    %v715 = vsub.f32 1.0, %v711
    %v716 = vsub.f32 1.0, %v712
    %v717 = vsub.f32 1.0, %v713
    %v718 = vsub.f32 1.0, %v714
    %v719 = vlog2.pop %v715
    %v720 = vmul.f32 %v719, 0.6931472
    %v721 = vlog2.pop %v716
    %v722 = vmul.f32 %v721, 0.6931472
    %v723 = vlog2.pop %v717
    %v724 = vmul.f32 %v723, 0.6931472
    %v725 = vlog2.pop %v718
    %v726 = vmul.f32 %v725, 0.6931472
    %v727 = vadd.f32 %v720, %v722
    %v728 = vadd.f32 %v727, %v724
    %v729 = vadd.f32 %v728, %v726
    %v730 = vrot.slane %v729, 4
    %v731 = vadd.f32 %v729, %v730
    %v732 = vrot.slane %v731, 2
    %v733 = vadd.f32 %v731, %v732
    %v734 = vrot.slane %v733, 1
    %v735 = vadd.f32 %v733, %v734
    %v736 = vadd.f32 %v686, %v735
    %v737 = vadd.f32 %v736, -1.0
    %v738 = vrcp.pop %v737
    %v739 = vmul.f32 -1.0, %v738
    %740 = vst [vmem:[#allocation2 + $0x6] sm:$0x1] %v739
    %v741 = vld [vmem:[%s1] sm:$0xff]
    %v742 = vld [vmem:[%s1 + $0x8] sm:$0xff]
    %v743 = vld [vmem:[%s1 + $0x10] sm:$0xff]
    %v744 = vld [vmem:[%s1 + $0x18] sm:$0xff]
    %746 = vset.pattern.permute.xlu0 7
    %747 = vperm.xlu0 %746, %v741
    %v748 = vpop.permute.xlu0 %747
    %751 = vset.pattern.permute.xlu0 7
    %752 = vperm.xlu0 %751, %v742
    %v753 = vpop.permute.xlu0 %752
    %756 = vset.pattern.permute.xlu0 7
    %757 = vperm.xlu0 %756, %v743
    %v758 = vpop.permute.xlu0 %757
    %761 = vset.pattern.permute.xlu0 7
    %762 = vperm.xlu0 %761, %v744
    %v763 = vpop.permute.xlu0 %762
    %v765 = vmul.f32 %v748, %v16
    %v766 = vmul.f32 %v753, %v17
    %v767 = vmul.f32 %v758, %v18
    %v768 = vmul.f32 %v763, %v19
    %v769 = vsub.f32 1.0, %v765
    %v770 = vsub.f32 1.0, %v766
    %v771 = vsub.f32 1.0, %v767
    %v772 = vsub.f32 1.0, %v768
    %v773 = vlog2.pop %v769
    %v774 = vmul.f32 %v773, 0.6931472
    %v775 = vlog2.pop %v770
    %v776 = vmul.f32 %v775, 0.6931472
    %v777 = vlog2.pop %v771
    %v778 = vmul.f32 %v777, 0.6931472
    %v779 = vlog2.pop %v772
    %v780 = vmul.f32 %v779, 0.6931472
    %v781 = vadd.f32 %v774, %v776
    %v782 = vadd.f32 %v781, %v778
    %v783 = vadd.f32 %v782, %v780
    %v784 = vrot.slane %v783, 4
    %v785 = vadd.f32 %v783, %v784
    %v786 = vrot.slane %v785, 2
    %v787 = vadd.f32 %v785, %v786
    %v788 = vrot.slane %v787, 1
    %v789 = vadd.f32 %v787, %v788
    %v790 = vld [vmem:[%s1 + $0x20] sm:$0xff]
    %v791 = vld [vmem:[%s1 + $0x28] sm:$0xff]
    %v792 = vld [vmem:[%s1 + $0x30] sm:$0xff]
    %v793 = vld [vmem:[%s1 + $0x38] sm:$0xff]
    %795 = vset.pattern.permute.xlu0 7
    %796 = vperm.xlu0 %795, %v790
    %v797 = vpop.permute.xlu0 %796
    %800 = vset.pattern.permute.xlu0 7
    %801 = vperm.xlu0 %800, %v791
    %v802 = vpop.permute.xlu0 %801
    %805 = vset.pattern.permute.xlu0 7
    %806 = vperm.xlu0 %805, %v792
    %v807 = vpop.permute.xlu0 %806
    %810 = vset.pattern.permute.xlu0 7
    %811 = vperm.xlu0 %810, %v793
    %v812 = vpop.permute.xlu0 %811
    %v814 = vmul.f32 %v797, %v12
    %v815 = vmul.f32 %v802, %v13
    %v816 = vmul.f32 %v807, %v14
    %v817 = vmul.f32 %v812, %v15
    %v818 = vsub.f32 1.0, %v814
    %v819 = vsub.f32 1.0, %v815
    %v820 = vsub.f32 1.0, %v816
    %v821 = vsub.f32 1.0, %v817
    %v822 = vlog2.pop %v818
    %v823 = vmul.f32 %v822, 0.6931472
    %v824 = vlog2.pop %v819
    %v825 = vmul.f32 %v824, 0.6931472
    %v826 = vlog2.pop %v820
    %v827 = vmul.f32 %v826, 0.6931472
    %v828 = vlog2.pop %v821
    %v829 = vmul.f32 %v828, 0.6931472
    %v830 = vadd.f32 %v823, %v825
    %v831 = vadd.f32 %v830, %v827
    %v832 = vadd.f32 %v831, %v829
    %v833 = vrot.slane %v832, 4
    %v834 = vadd.f32 %v832, %v833
    %v835 = vrot.slane %v834, 2
    %v836 = vadd.f32 %v834, %v835
    %v837 = vrot.slane %v836, 1
    %v838 = vadd.f32 %v836, %v837
    %v839 = vadd.f32 %v789, %v838
    %v840 = vadd.f32 %v839, -1.0
    %v841 = vrcp.pop %v840
    %v842 = vmul.f32 -1.0, %v841
    %843 = vst [vmem:[#allocation2 + $0x7] sm:$0x1] %v842
    %v844 = vld [vmem:[%s1] sm:$0xff]
    %v845 = vld [vmem:[%s1 + $0x8] sm:$0xff]
    %v846 = vld [vmem:[%s1 + $0x10] sm:$0xff]
    %v847 = vld [vmem:[%s1 + $0x18] sm:$0xff]
    %849 = vset.pattern.permute.xlu0 8
    %850 = vperm.xlu0 %849, %v844
    %v851 = vpop.permute.xlu0 %850
    %854 = vset.pattern.permute.xlu0 8
    %855 = vperm.xlu0 %854, %v845
    %v856 = vpop.permute.xlu0 %855
    %859 = vset.pattern.permute.xlu0 8
    %860 = vperm.xlu0 %859, %v846
    %v861 = vpop.permute.xlu0 %860
    %864 = vset.pattern.permute.xlu0 8
    %865 = vperm.xlu0 %864, %v847
    %v866 = vpop.permute.xlu0 %865
    %v868 = vmul.f32 %v851, %v16
    %v869 = vmul.f32 %v856, %v17
    %v870 = vmul.f32 %v861, %v18
    %v871 = vmul.f32 %v866, %v19
    %v872 = vsub.f32 1.0, %v868
    %v873 = vsub.f32 1.0, %v869
    %v874 = vsub.f32 1.0, %v870
    %v875 = vsub.f32 1.0, %v871
    %v876 = vlog2.pop %v872
    %v877 = vmul.f32 %v876, 0.6931472
    %v878 = vlog2.pop %v873
    %v879 = vmul.f32 %v878, 0.6931472
    %v880 = vlog2.pop %v874
    %v881 = vmul.f32 %v880, 0.6931472
    %v882 = vlog2.pop %v875
    %v883 = vmul.f32 %v882, 0.6931472
    %v884 = vadd.f32 %v877, %v879
    %v885 = vadd.f32 %v884, %v881
    %v886 = vadd.f32 %v885, %v883
    %v887 = vrot.slane %v886, 4
    %v888 = vadd.f32 %v886, %v887
    %v889 = vrot.slane %v888, 2
    %v890 = vadd.f32 %v888, %v889
    %v891 = vrot.slane %v890, 1
    %v892 = vadd.f32 %v890, %v891
    %v893 = vld [vmem:[%s1 + $0x20] sm:$0xff]
    %v894 = vld [vmem:[%s1 + $0x28] sm:$0xff]
    %v895 = vld [vmem:[%s1 + $0x30] sm:$0xff]
    %v896 = vld [vmem:[%s1 + $0x38] sm:$0xff]
    %898 = vset.pattern.permute.xlu0 8
    %899 = vperm.xlu0 %898, %v893
    %v900 = vpop.permute.xlu0 %899
    %903 = vset.pattern.permute.xlu0 8
    %904 = vperm.xlu0 %903, %v894
    %v905 = vpop.permute.xlu0 %904
    %908 = vset.pattern.permute.xlu0 8
    %909 = vperm.xlu0 %908, %v895
    %v910 = vpop.permute.xlu0 %909
    %913 = vset.pattern.permute.xlu0 8
    %914 = vperm.xlu0 %913, %v896
    %v915 = vpop.permute.xlu0 %914
    %v917 = vmul.f32 %v900, %v12
    %v918 = vmul.f32 %v905, %v13
    %v919 = vmul.f32 %v910, %v14
    %v920 = vmul.f32 %v915, %v15
    %v921 = vsub.f32 1.0, %v917
    %v922 = vsub.f32 1.0, %v918
    %v923 = vsub.f32 1.0, %v919
    %v924 = vsub.f32 1.0, %v920
    %v925 = vlog2.pop %v921
    %v926 = vmul.f32 %v925, 0.6931472
    %v927 = vlog2.pop %v922
    %v928 = vmul.f32 %v927, 0.6931472
    %v929 = vlog2.pop %v923
    %v930 = vmul.f32 %v929, 0.6931472
    %v931 = vlog2.pop %v924
    %v932 = vmul.f32 %v931, 0.6931472
    %v933 = vadd.f32 %v926, %v928
    %v934 = vadd.f32 %v933, %v930
    %v935 = vadd.f32 %v934, %v932
    %v936 = vrot.slane %v935, 4
    %v937 = vadd.f32 %v935, %v936
    %v938 = vrot.slane %v937, 2
    %v939 = vadd.f32 %v937, %v938
    %v940 = vrot.slane %v939, 1
    %v941 = vadd.f32 %v939, %v940
    %v942 = vadd.f32 %v892, %v941
    %v943 = vadd.f32 %v942, -1.0
    %v944 = vrcp.pop %v943
    %v945 = vmul.f32 -1.0, %v944
    %946 = vst [vmem:[#allocation2 + $0x8] sm:$0x1] %v945
    %v947 = vld [vmem:[%s1] sm:$0xff]
    %v948 = vld [vmem:[%s1 + $0x8] sm:$0xff]
    %v949 = vld [vmem:[%s1 + $0x10] sm:$0xff]
    %v950 = vld [vmem:[%s1 + $0x18] sm:$0xff]
    %952 = vset.pattern.permute.xlu0 9
    %953 = vperm.xlu0 %952, %v947
    %v954 = vpop.permute.xlu0 %953
    %957 = vset.pattern.permute.xlu0 9
    %958 = vperm.xlu0 %957, %v948
    %v959 = vpop.permute.xlu0 %958
    %962 = vset.pattern.permute.xlu0 9
    %963 = vperm.xlu0 %962, %v949
    %v964 = vpop.permute.xlu0 %963
    %967 = vset.pattern.permute.xlu0 9
    %968 = vperm.xlu0 %967, %v950
    %v969 = vpop.permute.xlu0 %968
    %v971 = vmul.f32 %v954, %v16
    %v972 = vmul.f32 %v959, %v17
    %v973 = vmul.f32 %v964, %v18
    %v974 = vmul.f32 %v969, %v19
    %v975 = vsub.f32 1.0, %v971
    %v976 = vsub.f32 1.0, %v972
    %v977 = vsub.f32 1.0, %v973
    %v978 = vsub.f32 1.0, %v974
    %v979 = vlog2.pop %v975
    %v980 = vmul.f32 %v979, 0.6931472
    %v981 = vlog2.pop %v976
    %v982 = vmul.f32 %v981, 0.6931472
    %v983 = vlog2.pop %v977
    %v984 = vmul.f32 %v983, 0.6931472
    %v985 = vlog2.pop %v978
    %v986 = vmul.f32 %v985, 0.6931472
    %v987 = vadd.f32 %v980, %v982
    %v988 = vadd.f32 %v987, %v984
    %v989 = vadd.f32 %v988, %v986
    %v990 = vrot.slane %v989, 4
    %v991 = vadd.f32 %v989, %v990
    %v992 = vrot.slane %v991, 2
    %v993 = vadd.f32 %v991, %v992
    %v994 = vrot.slane %v993, 1
    %v995 = vadd.f32 %v993, %v994
    %v996 = vld [vmem:[%s1 + $0x20] sm:$0xff]
    %v997 = vld [vmem:[%s1 + $0x28] sm:$0xff]
    %v998 = vld [vmem:[%s1 + $0x30] sm:$0xff]
    %v999 = vld [vmem:[%s1 + $0x38] sm:$0xff]
    %1001 = vset.pattern.permute.xlu0 9
    %1002 = vperm.xlu0 %1001, %v996
    %v1003 = vpop.permute.xlu0 %1002
    %1006 = vset.pattern.permute.xlu0 9
    %1007 = vperm.xlu0 %1006, %v997
    %v1008 = vpop.permute.xlu0 %1007
    %1011 = vset.pattern.permute.xlu0 9
    %1012 = vperm.xlu0 %1011, %v998
    %v1013 = vpop.permute.xlu0 %1012
    %1016 = vset.pattern.permute.xlu0 9
    %1017 = vperm.xlu0 %1016, %v999
    %v1018 = vpop.permute.xlu0 %1017
    %v1020 = vmul.f32 %v1003, %v12
    %v1021 = vmul.f32 %v1008, %v13
    %v1022 = vmul.f32 %v1013, %v14
    %v1023 = vmul.f32 %v1018, %v15
    %v1024 = vsub.f32 1.0, %v1020
    %v1025 = vsub.f32 1.0, %v1021
    %v1026 = vsub.f32 1.0, %v1022
    %v1027 = vsub.f32 1.0, %v1023
    %v1028 = vlog2.pop %v1024
    %v1029 = vmul.f32 %v1028, 0.6931472
    %v1030 = vlog2.pop %v1025
    %v1031 = vmul.f32 %v1030, 0.6931472
    %v1032 = vlog2.pop %v1026
    %v1033 = vmul.f32 %v1032, 0.6931472
    %v1034 = vlog2.pop %v1027
    %v1035 = vmul.f32 %v1034, 0.6931472
    %v1036 = vadd.f32 %v1029, %v1031
    %v1037 = vadd.f32 %v1036, %v1033
    %v1038 = vadd.f32 %v1037, %v1035
    %v1039 = vrot.slane %v1038, 4
    %v1040 = vadd.f32 %v1038, %v1039
    %v1041 = vrot.slane %v1040, 2
    %v1042 = vadd.f32 %v1040, %v1041
    %v1043 = vrot.slane %v1042, 1
    %v1044 = vadd.f32 %v1042, %v1043
    %v1045 = vadd.f32 %v995, %v1044
    %v1046 = vadd.f32 %v1045, -1.0
    %v1047 = vrcp.pop %v1046
    %v1048 = vmul.f32 -1.0, %v1047
    %1049 = vst [vmem:[#allocation2 + $0x9] sm:$0x1] %v1048
    %v1050 = vld [vmem:[%s1] sm:$0xff]
    %v1051 = vld [vmem:[%s1 + $0x8] sm:$0xff]
    %v1052 = vld [vmem:[%s1 + $0x10] sm:$0xff]
    %v1053 = vld [vmem:[%s1 + $0x18] sm:$0xff]
    %1055 = vset.pattern.permute.xlu0 10
    %1056 = vperm.xlu0 %1055, %v1050
    %v1057 = vpop.permute.xlu0 %1056
    %1060 = vset.pattern.permute.xlu0 10
    %1061 = vperm.xlu0 %1060, %v1051
    %v1062 = vpop.permute.xlu0 %1061
    %1065 = vset.pattern.permute.xlu0 10
    %1066 = vperm.xlu0 %1065, %v1052
    %v1067 = vpop.permute.xlu0 %1066
    %1070 = vset.pattern.permute.xlu0 10
    %1071 = vperm.xlu0 %1070, %v1053
    %v1072 = vpop.permute.xlu0 %1071
    %v1074 = vmul.f32 %v1057, %v16
    %v1075 = vmul.f32 %v1062, %v17
    %v1076 = vmul.f32 %v1067, %v18
    %v1077 = vmul.f32 %v1072, %v19
    %v1078 = vsub.f32 1.0, %v1074
    %v1079 = vsub.f32 1.0, %v1075
    %v1080 = vsub.f32 1.0, %v1076
    %v1081 = vsub.f32 1.0, %v1077
    %v1082 = vlog2.pop %v1078
    %v1083 = vmul.f32 %v1082, 0.6931472
    %v1084 = vlog2.pop %v1079
    %v1085 = vmul.f32 %v1084, 0.6931472
    %v1086 = vlog2.pop %v1080
    %v1087 = vmul.f32 %v1086, 0.6931472
    %v1088 = vlog2.pop %v1081
    %v1089 = vmul.f32 %v1088, 0.6931472
    %v1090 = vadd.f32 %v1083, %v1085
    %v1091 = vadd.f32 %v1090, %v1087
    %v1092 = vadd.f32 %v1091, %v1089
    %v1093 = vrot.slane %v1092, 4
    %v1094 = vadd.f32 %v1092, %v1093
    %v1095 = vrot.slane %v1094, 2
    %v1096 = vadd.f32 %v1094, %v1095
    %v1097 = vrot.slane %v1096, 1
    %v1098 = vadd.f32 %v1096, %v1097
    %v1099 = vld [vmem:[%s1 + $0x20] sm:$0xff]
    %v1100 = vld [vmem:[%s1 + $0x28] sm:$0xff]
    %v1101 = vld [vmem:[%s1 + $0x30] sm:$0xff]
    %v1102 = vld [vmem:[%s1 + $0x38] sm:$0xff]
    %1104 = vset.pattern.permute.xlu0 10
    %1105 = vperm.xlu0 %1104, %v1099
    %v1106 = vpop.permute.xlu0 %1105
    %1109 = vset.pattern.permute.xlu0 10
    %1110 = vperm.xlu0 %1109, %v1100
    %v1111 = vpop.permute.xlu0 %1110
    %1114 = vset.pattern.permute.xlu0 10
    %1115 = vperm.xlu0 %1114, %v1101
    %v1116 = vpop.permute.xlu0 %1115
    %1119 = vset.pattern.permute.xlu0 10
    %1120 = vperm.xlu0 %1119, %v1102
    %v1121 = vpop.permute.xlu0 %1120
    %v1123 = vmul.f32 %v1106, %v12
    %v1124 = vmul.f32 %v1111, %v13
    %v1125 = vmul.f32 %v1116, %v14
    %v1126 = vmul.f32 %v1121, %v15
    %v1127 = vsub.f32 1.0, %v1123
    %v1128 = vsub.f32 1.0, %v1124
    %v1129 = vsub.f32 1.0, %v1125
    %v1130 = vsub.f32 1.0, %v1126
    %v1131 = vlog2.pop %v1127
    %v1132 = vmul.f32 %v1131, 0.6931472
    %v1133 = vlog2.pop %v1128
    %v1134 = vmul.f32 %v1133, 0.6931472
    %v1135 = vlog2.pop %v1129
    %v1136 = vmul.f32 %v1135, 0.6931472
    %v1137 = vlog2.pop %v1130
    %v1138 = vmul.f32 %v1137, 0.6931472
    %v1139 = vadd.f32 %v1132, %v1134
    %v1140 = vadd.f32 %v1139, %v1136
    %v1141 = vadd.f32 %v1140, %v1138
    %v1142 = vrot.slane %v1141, 4
    %v1143 = vadd.f32 %v1141, %v1142
    %v1144 = vrot.slane %v1143, 2
    %v1145 = vadd.f32 %v1143, %v1144
    %v1146 = vrot.slane %v1145, 1
    %v1147 = vadd.f32 %v1145, %v1146
    %v1148 = vadd.f32 %v1098, %v1147
    %v1149 = vadd.f32 %v1148, -1.0
    %v1150 = vrcp.pop %v1149
    %v1151 = vmul.f32 -1.0, %v1150
    %1152 = vst [vmem:[#allocation2 + $0xa] sm:$0x1] %v1151
    %v1153 = vld [vmem:[%s1] sm:$0xff]
    %v1154 = vld [vmem:[%s1 + $0x8] sm:$0xff]
    %v1155 = vld [vmem:[%s1 + $0x10] sm:$0xff]
    %v1156 = vld [vmem:[%s1 + $0x18] sm:$0xff]
    %1158 = vset.pattern.permute.xlu0 11
    %1159 = vperm.xlu0 %1158, %v1153
    %v1160 = vpop.permute.xlu0 %1159
    %1163 = vset.pattern.permute.xlu0 11
    %1164 = vperm.xlu0 %1163, %v1154
    %v1165 = vpop.permute.xlu0 %1164
    %1168 = vset.pattern.permute.xlu0 11
    %1169 = vperm.xlu0 %1168, %v1155
    %v1170 = vpop.permute.xlu0 %1169
    %1173 = vset.pattern.permute.xlu0 11
    %1174 = vperm.xlu0 %1173, %v1156
    %v1175 = vpop.permute.xlu0 %1174
    %v1177 = vmul.f32 %v1160, %v16
    %v1178 = vmul.f32 %v1165, %v17
    %v1179 = vmul.f32 %v1170, %v18
    %v1180 = vmul.f32 %v1175, %v19
    %v1181 = vsub.f32 1.0, %v1177
    %v1182 = vsub.f32 1.0, %v1178
    %v1183 = vsub.f32 1.0, %v1179
    %v1184 = vsub.f32 1.0, %v1180
    %v1185 = vlog2.pop %v1181
    %v1186 = vmul.f32 %v1185, 0.6931472
    %v1187 = vlog2.pop %v1182
    %v1188 = vmul.f32 %v1187, 0.6931472
    %v1189 = vlog2.pop %v1183
    %v1190 = vmul.f32 %v1189, 0.6931472
    %v1191 = vlog2.pop %v1184
    %v1192 = vmul.f32 %v1191, 0.6931472
    %v1193 = vadd.f32 %v1186, %v1188
    %v1194 = vadd.f32 %v1193, %v1190
    %v1195 = vadd.f32 %v1194, %v1192
    %v1196 = vrot.slane %v1195, 4
    %v1197 = vadd.f32 %v1195, %v1196
    %v1198 = vrot.slane %v1197, 2
    %v1199 = vadd.f32 %v1197, %v1198
    %v1200 = vrot.slane %v1199, 1
    %v1201 = vadd.f32 %v1199, %v1200
    %v1202 = vld [vmem:[%s1 + $0x20] sm:$0xff]
    %v1203 = vld [vmem:[%s1 + $0x28] sm:$0xff]
    %v1204 = vld [vmem:[%s1 + $0x30] sm:$0xff]
    %v1205 = vld [vmem:[%s1 + $0x38] sm:$0xff]
    %1207 = vset.pattern.permute.xlu0 11
    %1208 = vperm.xlu0 %1207, %v1202
    %v1209 = vpop.permute.xlu0 %1208
    %1212 = vset.pattern.permute.xlu0 11
    %1213 = vperm.xlu0 %1212, %v1203
    %v1214 = vpop.permute.xlu0 %1213
    %1217 = vset.pattern.permute.xlu0 11
    %1218 = vperm.xlu0 %1217, %v1204
    %v1219 = vpop.permute.xlu0 %1218
    %1222 = vset.pattern.permute.xlu0 11
    %1223 = vperm.xlu0 %1222, %v1205
    %v1224 = vpop.permute.xlu0 %1223
    %v1226 = vmul.f32 %v1209, %v12
    %v1227 = vmul.f32 %v1214, %v13
    %v1228 = vmul.f32 %v1219, %v14
    %v1229 = vmul.f32 %v1224, %v15
    %v1230 = vsub.f32 1.0, %v1226
    %v1231 = vsub.f32 1.0, %v1227
    %v1232 = vsub.f32 1.0, %v1228
    %v1233 = vsub.f32 1.0, %v1229
    %v1234 = vlog2.pop %v1230
    %v1235 = vmul.f32 %v1234, 0.6931472
    %v1236 = vlog2.pop %v1231
    %v1237 = vmul.f32 %v1236, 0.6931472
    %v1238 = vlog2.pop %v1232
    %v1239 = vmul.f32 %v1238, 0.6931472
    %v1240 = vlog2.pop %v1233
    %v1241 = vmul.f32 %v1240, 0.6931472
    %v1242 = vadd.f32 %v1235, %v1237
    %v1243 = vadd.f32 %v1242, %v1239
    %v1244 = vadd.f32 %v1243, %v1241
    %v1245 = vrot.slane %v1244, 4
    %v1246 = vadd.f32 %v1244, %v1245
    %v1247 = vrot.slane %v1246, 2
    %v1248 = vadd.f32 %v1246, %v1247
    %v1249 = vrot.slane %v1248, 1
    %v1250 = vadd.f32 %v1248, %v1249
    %v1251 = vadd.f32 %v1201, %v1250
    %v1252 = vadd.f32 %v1251, -1.0
    %v1253 = vrcp.pop %v1252
    %v1254 = vmul.f32 -1.0, %v1253
    %1255 = vst [vmem:[#allocation2 + $0xb] sm:$0x1] %v1254
    %v1256 = vld [vmem:[%s1] sm:$0xff]
    %v1257 = vld [vmem:[%s1 + $0x8] sm:$0xff]
    %v1258 = vld [vmem:[%s1 + $0x10] sm:$0xff]
    %v1259 = vld [vmem:[%s1 + $0x18] sm:$0xff]
    %1261 = vset.pattern.permute.xlu0 12
    %1262 = vperm.xlu0 %1261, %v1256
    %v1263 = vpop.permute.xlu0 %1262
    %1266 = vset.pattern.permute.xlu0 12
    %1267 = vperm.xlu0 %1266, %v1257
    %v1268 = vpop.permute.xlu0 %1267
    %1271 = vset.pattern.permute.xlu0 12
    %1272 = vperm.xlu0 %1271, %v1258
    %v1273 = vpop.permute.xlu0 %1272
    %1276 = vset.pattern.permute.xlu0 12
    %1277 = vperm.xlu0 %1276, %v1259
    %v1278 = vpop.permute.xlu0 %1277
    %v1280 = vmul.f32 %v1263, %v16
    %v1281 = vmul.f32 %v1268, %v17
    %v1282 = vmul.f32 %v1273, %v18
    %v1283 = vmul.f32 %v1278, %v19
    %v1284 = vsub.f32 1.0, %v1280
    %v1285 = vsub.f32 1.0, %v1281
    %v1286 = vsub.f32 1.0, %v1282
    %v1287 = vsub.f32 1.0, %v1283
    %v1288 = vlog2.pop %v1284
    %v1289 = vmul.f32 %v1288, 0.6931472
    %v1290 = vlog2.pop %v1285
    %v1291 = vmul.f32 %v1290, 0.6931472
    %v1292 = vlog2.pop %v1286
    %v1293 = vmul.f32 %v1292, 0.6931472
    %v1294 = vlog2.pop %v1287
    %v1295 = vmul.f32 %v1294, 0.6931472
    %v1296 = vadd.f32 %v1289, %v1291
    %v1297 = vadd.f32 %v1296, %v1293
    %v1298 = vadd.f32 %v1297, %v1295
    %v1299 = vrot.slane %v1298, 4
    %v1300 = vadd.f32 %v1298, %v1299
    %v1301 = vrot.slane %v1300, 2
    %v1302 = vadd.f32 %v1300, %v1301
    %v1303 = vrot.slane %v1302, 1
    %v1304 = vadd.f32 %v1302, %v1303
    %v1305 = vld [vmem:[%s1 + $0x20] sm:$0xff]
    %v1306 = vld [vmem:[%s1 + $0x28] sm:$0xff]
    %v1307 = vld [vmem:[%s1 + $0x30] sm:$0xff]
    %v1308 = vld [vmem:[%s1 + $0x38] sm:$0xff]
    %1310 = vset.pattern.permute.xlu0 12
    %1311 = vperm.xlu0 %1310, %v1305
    %v1312 = vpop.permute.xlu0 %1311
    %1315 = vset.pattern.permute.xlu0 12
    %1316 = vperm.xlu0 %1315, %v1306
    %v1317 = vpop.permute.xlu0 %1316
    %1320 = vset.pattern.permute.xlu0 12
    %1321 = vperm.xlu0 %1320, %v1307
    %v1322 = vpop.permute.xlu0 %1321
    %1325 = vset.pattern.permute.xlu0 12
    %1326 = vperm.xlu0 %1325, %v1308
    %v1327 = vpop.permute.xlu0 %1326
    %v1329 = vmul.f32 %v1312, %v12
    %v1330 = vmul.f32 %v1317, %v13
    %v1331 = vmul.f32 %v1322, %v14
    %v1332 = vmul.f32 %v1327, %v15
    %v1333 = vsub.f32 1.0, %v1329
    %v1334 = vsub.f32 1.0, %v1330
    %v1335 = vsub.f32 1.0, %v1331
    %v1336 = vsub.f32 1.0, %v1332
    %v1337 = vlog2.pop %v1333
    %v1338 = vmul.f32 %v1337, 0.6931472
    %v1339 = vlog2.pop %v1334
    %v1340 = vmul.f32 %v1339, 0.6931472
    %v1341 = vlog2.pop %v1335
    %v1342 = vmul.f32 %v1341, 0.6931472
    %v1343 = vlog2.pop %v1336
    %v1344 = vmul.f32 %v1343, 0.6931472
    %v1345 = vadd.f32 %v1338, %v1340
    %v1346 = vadd.f32 %v1345, %v1342
    %v1347 = vadd.f32 %v1346, %v1344
    %v1348 = vrot.slane %v1347, 4
    %v1349 = vadd.f32 %v1347, %v1348
    %v1350 = vrot.slane %v1349, 2
    %v1351 = vadd.f32 %v1349, %v1350
    %v1352 = vrot.slane %v1351, 1
    %v1353 = vadd.f32 %v1351, %v1352
    %v1354 = vadd.f32 %v1304, %v1353
    %v1355 = vadd.f32 %v1354, -1.0
    %v1356 = vrcp.pop %v1355
    %v1357 = vmul.f32 -1.0, %v1356
    %1358 = vst [vmem:[#allocation2 + $0xc] sm:$0x1] %v1357
    %v1359 = vld [vmem:[%s1] sm:$0xff]
    %v1360 = vld [vmem:[%s1 + $0x8] sm:$0xff]
    %v1361 = vld [vmem:[%s1 + $0x10] sm:$0xff]
    %v1362 = vld [vmem:[%s1 + $0x18] sm:$0xff]
    %1364 = vset.pattern.permute.xlu0 13
    %1365 = vperm.xlu0 %1364, %v1359
    %v1366 = vpop.permute.xlu0 %1365
    %1369 = vset.pattern.permute.xlu0 13
    %1370 = vperm.xlu0 %1369, %v1360
    %v1371 = vpop.permute.xlu0 %1370
    %1374 = vset.pattern.permute.xlu0 13
    %1375 = vperm.xlu0 %1374, %v1361
    %v1376 = vpop.permute.xlu0 %1375
    %1379 = vset.pattern.permute.xlu0 13
    %1380 = vperm.xlu0 %1379, %v1362
    %v1381 = vpop.permute.xlu0 %1380
    %v1383 = vmul.f32 %v1366, %v16
    %v1384 = vmul.f32 %v1371, %v17
    %v1385 = vmul.f32 %v1376, %v18
    %v1386 = vmul.f32 %v1381, %v19
    %v1387 = vsub.f32 1.0, %v1383
    %v1388 = vsub.f32 1.0, %v1384
    %v1389 = vsub.f32 1.0, %v1385
    %v1390 = vsub.f32 1.0, %v1386
    %v1391 = vlog2.pop %v1387
    %v1392 = vmul.f32 %v1391, 0.6931472
    %v1393 = vlog2.pop %v1388
    %v1394 = vmul.f32 %v1393, 0.6931472
    %v1395 = vlog2.pop %v1389
    %v1396 = vmul.f32 %v1395, 0.6931472
    %v1397 = vlog2.pop %v1390
    %v1398 = vmul.f32 %v1397, 0.6931472
    %v1399 = vadd.f32 %v1392, %v1394
    %v1400 = vadd.f32 %v1399, %v1396
    %v1401 = vadd.f32 %v1400, %v1398
    %v1402 = vrot.slane %v1401, 4
    %v1403 = vadd.f32 %v1401, %v1402
    %v1404 = vrot.slane %v1403, 2
    %v1405 = vadd.f32 %v1403, %v1404
    %v1406 = vrot.slane %v1405, 1
    %v1407 = vadd.f32 %v1405, %v1406
    %v1408 = vld [vmem:[%s1 + $0x20] sm:$0xff]
    %v1409 = vld [vmem:[%s1 + $0x28] sm:$0xff]
    %v1410 = vld [vmem:[%s1 + $0x30] sm:$0xff]
    %v1411 = vld [vmem:[%s1 + $0x38] sm:$0xff]
    %1413 = vset.pattern.permute.xlu0 13
    %1414 = vperm.xlu0 %1413, %v1408
    %v1415 = vpop.permute.xlu0 %1414
    %1418 = vset.pattern.permute.xlu0 13
    %1419 = vperm.xlu0 %1418, %v1409
    %v1420 = vpop.permute.xlu0 %1419
    %1423 = vset.pattern.permute.xlu0 13
    %1424 = vperm.xlu0 %1423, %v1410
    %v1425 = vpop.permute.xlu0 %1424
    %1428 = vset.pattern.permute.xlu0 13
    %1429 = vperm.xlu0 %1428, %v1411
    %v1430 = vpop.permute.xlu0 %1429
    %v1432 = vmul.f32 %v1415, %v12
    %v1433 = vmul.f32 %v1420, %v13
    %v1434 = vmul.f32 %v1425, %v14
    %v1435 = vmul.f32 %v1430, %v15
    %v1436 = vsub.f32 1.0, %v1432
    %v1437 = vsub.f32 1.0, %v1433
    %v1438 = vsub.f32 1.0, %v1434
    %v1439 = vsub.f32 1.0, %v1435
    %v1440 = vlog2.pop %v1436
    %v1441 = vmul.f32 %v1440, 0.6931472
    %v1442 = vlog2.pop %v1437
    %v1443 = vmul.f32 %v1442, 0.6931472
    %v1444 = vlog2.pop %v1438
    %v1445 = vmul.f32 %v1444, 0.6931472
    %v1446 = vlog2.pop %v1439
    %v1447 = vmul.f32 %v1446, 0.6931472
    %v1448 = vadd.f32 %v1441, %v1443
    %v1449 = vadd.f32 %v1448, %v1445
    %v1450 = vadd.f32 %v1449, %v1447
    %v1451 = vrot.slane %v1450, 4
    %v1452 = vadd.f32 %v1450, %v1451
    %v1453 = vrot.slane %v1452, 2
    %v1454 = vadd.f32 %v1452, %v1453
    %v1455 = vrot.slane %v1454, 1
    %v1456 = vadd.f32 %v1454, %v1455
    %v1457 = vadd.f32 %v1407, %v1456
    %v1458 = vadd.f32 %v1457, -1.0
    %v1459 = vrcp.pop %v1458
    %v1460 = vmul.f32 -1.0, %v1459
    %1461 = vst [vmem:[#allocation2 + $0xd] sm:$0x1] %v1460
    %v1462 = vld [vmem:[%s1] sm:$0xff]
    %v1463 = vld [vmem:[%s1 + $0x8] sm:$0xff]
    %v1464 = vld [vmem:[%s1 + $0x10] sm:$0xff]
    %v1465 = vld [vmem:[%s1 + $0x18] sm:$0xff]
    %1467 = vset.pattern.permute.xlu0 14
    %1468 = vperm.xlu0 %1467, %v1462
    %v1469 = vpop.permute.xlu0 %1468
    %1472 = vset.pattern.permute.xlu0 14
    %1473 = vperm.xlu0 %1472, %v1463
    %v1474 = vpop.permute.xlu0 %1473
    %1477 = vset.pattern.permute.xlu0 14
    %1478 = vperm.xlu0 %1477, %v1464
    %v1479 = vpop.permute.xlu0 %1478
    %1482 = vset.pattern.permute.xlu0 14
    %1483 = vperm.xlu0 %1482, %v1465
    %v1484 = vpop.permute.xlu0 %1483
    %v1486 = vmul.f32 %v1469, %v16
    %v1487 = vmul.f32 %v1474, %v17
    %v1488 = vmul.f32 %v1479, %v18
    %v1489 = vmul.f32 %v1484, %v19
    %v1490 = vsub.f32 1.0, %v1486
    %v1491 = vsub.f32 1.0, %v1487
    %v1492 = vsub.f32 1.0, %v1488
    %v1493 = vsub.f32 1.0, %v1489
    %v1494 = vlog2.pop %v1490
    %v1495 = vmul.f32 %v1494, 0.6931472
    %v1496 = vlog2.pop %v1491
    %v1497 = vmul.f32 %v1496, 0.6931472
    %v1498 = vlog2.pop %v1492
    %v1499 = vmul.f32 %v1498, 0.6931472
    %v1500 = vlog2.pop %v1493
    %v1501 = vmul.f32 %v1500, 0.6931472
    %v1502 = vadd.f32 %v1495, %v1497
    %v1503 = vadd.f32 %v1502, %v1499
    %v1504 = vadd.f32 %v1503, %v1501
    %v1505 = vrot.slane %v1504, 4
    %v1506 = vadd.f32 %v1504, %v1505
    %v1507 = vrot.slane %v1506, 2
    %v1508 = vadd.f32 %v1506, %v1507
    %v1509 = vrot.slane %v1508, 1
    %v1510 = vadd.f32 %v1508, %v1509
    %v1511 = vld [vmem:[%s1 + $0x20] sm:$0xff]
    %v1512 = vld [vmem:[%s1 + $0x28] sm:$0xff]
    %v1513 = vld [vmem:[%s1 + $0x30] sm:$0xff]
    %v1514 = vld [vmem:[%s1 + $0x38] sm:$0xff]
    %1516 = vset.pattern.permute.xlu0 14
    %1517 = vperm.xlu0 %1516, %v1511
    %v1518 = vpop.permute.xlu0 %1517
    %1521 = vset.pattern.permute.xlu0 14
    %1522 = vperm.xlu0 %1521, %v1512
    %v1523 = vpop.permute.xlu0 %1522
    %1526 = vset.pattern.permute.xlu0 14
    %1527 = vperm.xlu0 %1526, %v1513
    %v1528 = vpop.permute.xlu0 %1527
    %1531 = vset.pattern.permute.xlu0 14
    %1532 = vperm.xlu0 %1531, %v1514
    %v1533 = vpop.permute.xlu0 %1532
    %v1535 = vmul.f32 %v1518, %v12
    %v1536 = vmul.f32 %v1523, %v13
    %v1537 = vmul.f32 %v1528, %v14
    %v1538 = vmul.f32 %v1533, %v15
    %v1539 = vsub.f32 1.0, %v1535
    %v1540 = vsub.f32 1.0, %v1536
    %v1541 = vsub.f32 1.0, %v1537
    %v1542 = vsub.f32 1.0, %v1538
    %v1543 = vlog2.pop %v1539
    %v1544 = vmul.f32 %v1543, 0.6931472
    %v1545 = vlog2.pop %v1540
    %v1546 = vmul.f32 %v1545, 0.6931472
    %v1547 = vlog2.pop %v1541
    %v1548 = vmul.f32 %v1547, 0.6931472
    %v1549 = vlog2.pop %v1542
    %v1550 = vmul.f32 %v1549, 0.6931472
    %v1551 = vadd.f32 %v1544, %v1546
    %v1552 = vadd.f32 %v1551, %v1548
    %v1553 = vadd.f32 %v1552, %v1550
    %v1554 = vrot.slane %v1553, 4
    %v1555 = vadd.f32 %v1553, %v1554
    %v1556 = vrot.slane %v1555, 2
    %v1557 = vadd.f32 %v1555, %v1556
    %v1558 = vrot.slane %v1557, 1
    %v1559 = vadd.f32 %v1557, %v1558
    %v1560 = vadd.f32 %v1510, %v1559
    %v1561 = vadd.f32 %v1560, -1.0
    %v1562 = vrcp.pop %v1561
    %v1563 = vmul.f32 -1.0, %v1562
    %1564 = vst [vmem:[#allocation2 + $0xe] sm:$0x1] %v1563
    %v1565 = vld [vmem:[%s1] sm:$0xff]
    %v1566 = vld [vmem:[%s1 + $0x8] sm:$0xff]
    %v1567 = vld [vmem:[%s1 + $0x10] sm:$0xff]
    %v1568 = vld [vmem:[%s1 + $0x18] sm:$0xff]
    %1570 = vset.pattern.permute.xlu0 15
    %1571 = vperm.xlu0 %1570, %v1565
    %v1572 = vpop.permute.xlu0 %1571
    %1575 = vset.pattern.permute.xlu0 15
    %1576 = vperm.xlu0 %1575, %v1566
    %v1577 = vpop.permute.xlu0 %1576
    %1580 = vset.pattern.permute.xlu0 15
    %1581 = vperm.xlu0 %1580, %v1567
    %v1582 = vpop.permute.xlu0 %1581
    %1585 = vset.pattern.permute.xlu0 15
    %1586 = vperm.xlu0 %1585, %v1568
    %v1587 = vpop.permute.xlu0 %1586
    %v1589 = vmul.f32 %v1572, %v16
    %v1590 = vmul.f32 %v1577, %v17
    %v1591 = vmul.f32 %v1582, %v18
    %v1592 = vmul.f32 %v1587, %v19
    %v1593 = vsub.f32 1.0, %v1589
    %v1594 = vsub.f32 1.0, %v1590
    %v1595 = vsub.f32 1.0, %v1591
    %v1596 = vsub.f32 1.0, %v1592
    %v1597 = vlog2.pop %v1593
    %v1598 = vmul.f32 %v1597, 0.6931472
    %v1599 = vlog2.pop %v1594
    %v1600 = vmul.f32 %v1599, 0.6931472
    %v1601 = vlog2.pop %v1595
    %v1602 = vmul.f32 %v1601, 0.6931472
    %v1603 = vlog2.pop %v1596
    %v1604 = vmul.f32 %v1603, 0.6931472
    %v1605 = vadd.f32 %v1598, %v1600
    %v1606 = vadd.f32 %v1605, %v1602
    %v1607 = vadd.f32 %v1606, %v1604
    %v1608 = vrot.slane %v1607, 4
    %v1609 = vadd.f32 %v1607, %v1608
    %v1610 = vrot.slane %v1609, 2
    %v1611 = vadd.f32 %v1609, %v1610
    %v1612 = vrot.slane %v1611, 1
    %v1613 = vadd.f32 %v1611, %v1612
    %v1614 = vld [vmem:[%s1 + $0x20] sm:$0xff]
    %v1615 = vld [vmem:[%s1 + $0x28] sm:$0xff]
    %v1616 = vld [vmem:[%s1 + $0x30] sm:$0xff]
    %v1617 = vld [vmem:[%s1 + $0x38] sm:$0xff]
    %1619 = vset.pattern.permute.xlu0 15
    %1620 = vperm.xlu0 %1619, %v1614
    %v1621 = vpop.permute.xlu0 %1620
    %1624 = vset.pattern.permute.xlu0 15
    %1625 = vperm.xlu0 %1624, %v1615
    %v1626 = vpop.permute.xlu0 %1625
    %1629 = vset.pattern.permute.xlu0 15
    %1630 = vperm.xlu0 %1629, %v1616
    %v1631 = vpop.permute.xlu0 %1630
    %1634 = vset.pattern.permute.xlu0 15
    %1635 = vperm.xlu0 %1634, %v1617
    %v1636 = vpop.permute.xlu0 %1635
    %v1638 = vmul.f32 %v1621, %v12
    %v1639 = vmul.f32 %v1626, %v13
    %v1640 = vmul.f32 %v1631, %v14
    %v1641 = vmul.f32 %v1636, %v15
    %v1642 = vsub.f32 1.0, %v1638
    %v1643 = vsub.f32 1.0, %v1639
    %v1644 = vsub.f32 1.0, %v1640
    %v1645 = vsub.f32 1.0, %v1641
    %v1646 = vlog2.pop %v1642
    %v1647 = vmul.f32 %v1646, 0.6931472
    %v1648 = vlog2.pop %v1643
    %v1649 = vmul.f32 %v1648, 0.6931472
    %v1650 = vlog2.pop %v1644
    %v1651 = vmul.f32 %v1650, 0.6931472
    %v1652 = vlog2.pop %v1645
    %v1653 = vmul.f32 %v1652, 0.6931472
    %v1654 = vadd.f32 %v1647, %v1649
    %v1655 = vadd.f32 %v1654, %v1651
    %v1656 = vadd.f32 %v1655, %v1653
    %v1657 = vrot.slane %v1656, 4
    %v1658 = vadd.f32 %v1656, %v1657
    %v1659 = vrot.slane %v1658, 2
    %v1660 = vadd.f32 %v1658, %v1659
    %v1661 = vrot.slane %v1660, 1
    %v1662 = vadd.f32 %v1660, %v1661
    %v1663 = vadd.f32 %v1613, %v1662
    %v1664 = vadd.f32 %v1663, -1.0
    %v1665 = vrcp.pop %v1664
    %v1666 = vmul.f32 -1.0, %v1665
    %1667 = vst [vmem:[#allocation2 + $0xf] sm:$0x1] %v1666
    // Predicated region
    $region10: #{tpu_custom_call.1} parent=1 // pred_check
      _
    $region11: #{tpu_custom_call.1} parent=1 // pred_check_branch
      %1669 = sbr.rel (0) target = $region13
    $region12: #{tpu_custom_call.1} parent=1 // pred_region
      %s1671 = ssub.s32 256, 256
      %1672 = vsyncadd [#allocation3], %s1671
      %s1673 = sshll.u32 [#allocation2], 4
      %s1674 = int_to_ptr.vmem [resolvable:$true] %s1673
      %1679 = dma.vmem_to_hbm [thread:$0]  %s1674, 256, %s2, [#allocation3], 128, 128, 8
    $region13: #{tpu_custom_call.1} parent=1 // pred_fallthru
      _
    // Predicated region
    $region14: #{tpu_custom_call.1} parent=1 // pred_check
      _
    $region15: #{tpu_custom_call.1} parent=1 // pred_check_branch
      %1681 = sbr.rel (0) target = $region17
    $region16: #{tpu_custom_call.1} parent=1 // pred_region
      %1682 = dma.done [#allocation3], 256
    $region17: #{tpu_custom_call.1} parent=1 // pred_fallthru
      _
    %1683 = vsyncpa [#allocation3], 1

</llo_original>
